<compile_context>
chip_gen: v7x
topology: tpu7x:2x2x1
jax: 0.10.0
libtpu: 0.0.40
codegen_flags: <defaults>
</compile_context>

<pallas_src>
import math
from functools import partial

import jax
import jax.numpy as jnp
from jax.experimental import pallas as pl
from jax.experimental.pallas import tpu as pltpu


# ---------------------------------------------------------------------------
# Fused MHA kernel: one grid step == one batch element, all heads.
# ---------------------------------------------------------------------------
def _mha_fused_kernel(q_in_ref, k_in_ref, v_in_ref,
                      wq_ref, bq_ref, wk_ref, bk_ref, wv_ref, bv_ref,
                      wo_ref, bo_ref,
                      out_ref, attn_ref,
                      q_s, k_s, v_s, ctx_s,
                      *, nhead, d_k, scale):
    # ---- Q/K/V projections: full-width (D-deep, D-wide) MXU matmuls --------
    q_s[...] = (jnp.dot(q_in_ref[...], wq_ref[...],
                        preferred_element_type=jnp.float32) + bq_ref[...])
    k_s[...] = (jnp.dot(k_in_ref[...], wk_ref[...],
                        preferred_element_type=jnp.float32) + bk_ref[...])
    v_s[...] = (jnp.dot(v_in_ref[...], wv_ref[...],
                        preferred_element_type=jnp.float32) + bv_ref[...])

    # ---- per-head attention (static unroll; head slices are ref loads) -----
    for h in range(nhead):
        qh = q_s[:, pl.ds(h * d_k, d_k)]                       # (Nq, d_k)
        kh = k_s[:, pl.ds(h * d_k, d_k)]                       # (Nk, d_k)
        vh = v_s[:, pl.ds(h * d_k, d_k)]                       # (Nk, d_k)

        # scores = (qh @ kh^T) / sqrt(d_k)
        s = jax.lax.dot_general(
            qh, kh, (((1,), (1,)), ((), ())),
            preferred_element_type=jnp.float32) * scale        # (Nq, Nk)

        # numerically-stable softmax over keys, with the module's extra
        # attn/(sum(attn)+1e-6) renorm folded into the same reciprocal:
        #   softmax(s) / (sum(softmax(s)) + 1e-6)  ==  p / (sum(p) * (1+1e-6))
        m = jnp.max(s, axis=-1, keepdims=True)
        p = jnp.exp(s - m)
        sum_p = jnp.sum(p, axis=-1, keepdims=True)
        attn = p * pl.reciprocal(sum_p * (1.0 + 1e-6), approx=True)

        # TODO(synk): nn.Dropout(p=0.1) is identity in eval mode; training-mode
        # dropout (pltpu.prng_* mask) is not implemented in-kernel.

        attn_ref[h, :, :] = attn.astype(attn_ref.dtype)        # (Nq, Nk)

        # context for this head lands lane-contiguously inside (Nq, D) scratch
        ctx_s[:, pl.ds(h * d_k, d_k)] = jnp.dot(
            attn, vh, preferred_element_type=jnp.float32)      # (Nq, d_k)

    # ---- output projection: one wide (Nq, D) @ (D, D) matmul ----------------
    out = (jnp.dot(ctx_s[...], wo_ref[...],
                   preferred_element_type=jnp.float32) + bo_ref[...])
    out_ref[...] = out.astype(out_ref.dtype)


# ---------------------------------------------------------------------------
# Wrapper: single pallas_call for the whole forward pass.
# ---------------------------------------------------------------------------
def mha_forward(query, key, value, params, nhead, attn_mask=None):
    # TODO(synk): attn_mask (masked_fill with -inf before softmax) not implemented.
    assert attn_mask is None

    B, Nq, D = query.shape
    Nk = key.shape[1]
    assert D % nhead == 0
    d_k = D // nhead
    scale = 1.0 / math.sqrt(d_k)

    kernel = partial(_mha_fused_kernel, nhead=nhead, d_k=d_k, scale=scale)

    flops = (2 * B * (Nq + 2 * Nk) * D * D        # QKV projections
             + 4 * B * Nq * Nk * D                # scores + context
             + 2 * B * Nq * D * D)                # output projection
    bytes_accessed = 4 * (B * (Nq + 2 * Nk) * D          # inputs
                          + 4 * D * D + 4 * D            # weights + biases
                          + B * Nq * D                   # attn_output
                          + B * nhead * Nq * Nk)         # attn_weights
    cost = pl.CostEstimate(flops=flops,
                           transcendentals=B * nhead * Nq * (Nk + 1),
                           bytes_accessed=bytes_accessed)

    resident = lambda b: (0, 0)   # weights / biases stay in VMEM across steps

    grid_spec = pltpu.PrefetchScalarGridSpec(
        num_scalar_prefetch=0,
        grid=(B,),
        in_specs=[
            pl.BlockSpec((None, Nq, D), lambda b: (b, 0, 0)),   # query
            pl.BlockSpec((None, Nk, D), lambda b: (b, 0, 0)),   # key
            pl.BlockSpec((None, Nk, D), lambda b: (b, 0, 0)),   # value
            pl.BlockSpec((D, D), resident), pl.BlockSpec((1, D), resident),  # W_q, b_q
            pl.BlockSpec((D, D), resident), pl.BlockSpec((1, D), resident),  # W_k, b_k
            pl.BlockSpec((D, D), resident), pl.BlockSpec((1, D), resident),  # W_v, b_v
            pl.BlockSpec((D, D), resident), pl.BlockSpec((1, D), resident),  # W_o, b_o
        ],
        out_specs=[
            pl.BlockSpec((None, Nq, D), lambda b: (b, 0, 0)),          # attn_output
            pl.BlockSpec((None, nhead, Nq, Nk), lambda b: (b, 0, 0, 0)),  # attn_weights
        ],
        scratch_shapes=[
            pltpu.VMEM((Nq, D), jnp.float32),   # Q
            pltpu.VMEM((Nk, D), jnp.float32),   # K
            pltpu.VMEM((Nk, D), jnp.float32),   # V
            pltpu.VMEM((Nq, D), jnp.float32),   # context (head-merged)
        ],
    )

    out, attn = pl.pallas_call(
        kernel,
        out_shape=(
            jax.ShapeDtypeStruct((B, Nq, D), jnp.float32),
            jax.ShapeDtypeStruct((B, nhead, Nq, Nk), jnp.float32),
        ),
        grid_spec=grid_spec,
        compiler_params=pltpu.CompilerParams(dimension_semantics=("parallel",)),
        cost_estimate=cost,
    )(query, key, value,
      params["wq_t"], params["bq"].reshape(1, D),
      params["wk_t"], params["bk"].reshape(1, D),
      params["wv_t"], params["bv"].reshape(1, D),
      params["wo_t"], params["bo"].reshape(1, D))
    return out, attn


# ---------------------------------------------------------------------------
# Pure-JAX reference (mirrors the PyTorch module, eval mode) for parity checks
# ---------------------------------------------------------------------------
def mha_reference(query, key, value, params, nhead):
    B, Nq, D = query.shape
    d_k = D // nhead
    Q = query @ params["wq_t"] + params["bq"]
    K = key @ params["wk_t"] + params["bk"]
    V = value @ params["wv_t"] + params["bv"]
    qh = Q.reshape(B, Nq, nhead, d_k).transpose(0, 2, 1, 3)
    kh = K.reshape(B, -1, nhead, d_k).transpose(0, 2, 1, 3)
    vh = V.reshape(B, -1, nhead, d_k).transpose(0, 2, 1, 3)
    s = jnp.einsum("bhqd,bhkd->bhqk", qh, kh) / math.sqrt(d_k)
    attn = jax.nn.softmax(s, axis=-1)
    attn = attn / (attn.sum(-1, keepdims=True) + 1e-6)
    ctx = jnp.einsum("bhqk,bhkd->bhqd", attn, vh)
    ctx = ctx.transpose(0, 2, 1, 3).reshape(B, Nq, D)
    out = ctx @ params["wo_t"] + params["bo"]
    return out, attn


if __name__ == "__main__":
    B, N, d_model, nhead = 2, 16, 32, 4
    root = jax.random.PRNGKey(0)
    ks = jax.random.split(root, 7)

    query = jax.random.normal(ks[0], (B, N, d_model), jnp.float32)
    key_in = jax.random.normal(ks[1], (B, N, d_model), jnp.float32)
    value = jax.random.normal(ks[2], (B, N, d_model), jnp.float32)

    # xavier_uniform weights (stored pre-transposed: (in, out)), zero biases
    limit = math.sqrt(6.0 / (d_model + d_model))
    def _xavier(k):
        return jax.random.uniform(k, (d_model, d_model), jnp.float32, -limit, limit)

    params = {
        "wq_t": _xavier(ks[3]), "bq": jnp.zeros((d_model,), jnp.float32),
        "wk_t": _xavier(ks[4]), "bk": jnp.zeros((d_model,), jnp.float32),
        "wv_t": _xavier(ks[5]), "bv": jnp.zeros((d_model,), jnp.float32),
        "wo_t": _xavier(ks[6]), "bo": jnp.zeros((d_model,), jnp.float32),
    }

    out, attn_w = mha_forward(query, key_in, value, params, nhead)
    jax.block_until_ready((out, attn_w))

    assert out.shape == (B, N, d_model)
    assert attn_w.shape == (B, nhead, N, N)
    assert bool(jnp.all(jnp.isfinite(out)))
    # attention rows sum to ~1 (modulo the +1e-6 renorm and approx reciprocal)
    assert bool(jnp.all(jnp.abs(attn_w.sum(-1) - 1.0) < 5e-3))

    # parity against the pure-JAX reference (tolerance covers MXU / approx-recip)
    ref_out, ref_attn = mha_reference(query, key_in, value, params, nhead)
    assert bool(jnp.allclose(out, ref_out, rtol=5e-2, atol=5e-2))
    assert bool(jnp.allclose(attn_w, ref_attn, rtol=5e-2, atol=5e-2))

    print("KERNEL_OK")
</pallas_src>

<mosaic_0001>
module attributes {stable_mosaic.version = 11 : i64} {
  func.func @_mha_fused_kernel(%arg0: i32, %arg1: memref<1x16x32xf32, #tpu.memory_space<vmem>>, %arg2: memref<1x16x32xf32, #tpu.memory_space<vmem>>, %arg3: memref<1x16x32xf32, #tpu.memory_space<vmem>>, %arg4: memref<32x32xf32, #tpu.memory_space<vmem>>, %arg5: memref<1x32xf32, #tpu.memory_space<vmem>>, %arg6: memref<32x32xf32, #tpu.memory_space<vmem>>, %arg7: memref<1x32xf32, #tpu.memory_space<vmem>>, %arg8: memref<32x32xf32, #tpu.memory_space<vmem>>, %arg9: memref<1x32xf32, #tpu.memory_space<vmem>>, %arg10: memref<32x32xf32, #tpu.memory_space<vmem>>, %arg11: memref<1x32xf32, #tpu.memory_space<vmem>>, %arg12: memref<1x16x32xf32, #tpu.memory_space<vmem>>, %arg13: memref<1x4x16x16xf32, #tpu.memory_space<vmem>>, %arg14: memref<16x32xf32, #tpu.memory_space<vmem>>, %arg15: memref<16x32xf32, #tpu.memory_space<vmem>>, %arg16: memref<16x32xf32, #tpu.memory_space<vmem>>, %arg17: memref<16x32xf32, #tpu.memory_space<vmem>>) attributes {dimension_semantics = [#tpu.dimension_semantics<parallel>], iteration_bounds = array<i64: 2>, scalar_prefetch = 0 : i64, scratch_operands = 4 : i64, tpu.core_type = #tpu.core_type<tc>, window_params = [{transform_indices = @transform_0, window_bounds = array<i64: 1, 16, 32>}, {transform_indices = @transform_1, window_bounds = array<i64: 1, 16, 32>}, {transform_indices = @transform_2, window_bounds = array<i64: 1, 16, 32>}, {pipeline_mode = #tpu.pipeline_mode<synchronous>, transform_indices = @transform_3, window_bounds = array<i64: 32, 32>}, {pipeline_mode = #tpu.pipeline_mode<synchronous>, transform_indices = @transform_4, window_bounds = array<i64: 1, 32>}, {pipeline_mode = #tpu.pipeline_mode<synchronous>, transform_indices = @transform_5, window_bounds = array<i64: 32, 32>}, {pipeline_mode = #tpu.pipeline_mode<synchronous>, transform_indices = @transform_6, window_bounds = array<i64: 1, 32>}, {pipeline_mode = #tpu.pipeline_mode<synchronous>, transform_indices = @transform_7, window_bounds = array<i64: 32, 32>}, {pipeline_mode = #tpu.pipeline_mode<synchronous>, transform_indices = @transform_8, window_bounds = array<i64: 1, 32>}, {pipeline_mode = #tpu.pipeline_mode<synchronous>, transform_indices = @transform_9, window_bounds = array<i64: 32, 32>}, {pipeline_mode = #tpu.pipeline_mode<synchronous>, transform_indices = @transform_10, window_bounds = array<i64: 1, 32>}, {transform_indices = @transform_11, window_bounds = array<i64: 1, 16, 32>}, {transform_indices = @transform_12, window_bounds = array<i64: 1, 4, 16, 16>}]} {
    %c0 = arith.constant 0 : index
    %c0_0 = arith.constant 0 : index
    %c0_1 = arith.constant 0 : index
    %0 = vector.load %arg1[%c0, %c0_0, %c0_1] : memref<1x16x32xf32, #tpu.memory_space<vmem>>, vector<1x16x32xf32>
    %1 = vector.shape_cast %0 : vector<1x16x32xf32> to vector<16x32xf32>
    %c0_2 = arith.constant 0 : index
    %c0_3 = arith.constant 0 : index
    %2 = vector.load %arg4[%c0_2, %c0_3] : memref<32x32xf32, #tpu.memory_space<vmem>>, vector<32x32xf32>
    %cst = arith.constant dense<0.000000e+00> : vector<16x32xf32>
    %3 = tpu.matmul %1, %2, %cst {dimension_numbers = #tpu.dot_dimension_numbers<[1], [0], [0], [1], [0, 0, 1, 1], [], []>} : vector<16x32xf32>, vector<32x32xf32>, vector<16x32xf32> -> vector<16x32xf32>
    %c0_4 = arith.constant 0 : index
    %c0_5 = arith.constant 0 : index
    %4 = vector.load %arg5[%c0_4, %c0_5] : memref<1x32xf32, #tpu.memory_space<vmem>>, vector<1x32xf32>
    %5 = vector.broadcast %4 : vector<1x32xf32> to vector<16x32xf32>
    %6 = arith.addf %3, %5 : vector<16x32xf32>
    %c0_6 = arith.constant 0 : index
    %c0_7 = arith.constant 0 : index
    %7 = vector.load %arg14[%c0_6, %c0_7] : memref<16x32xf32, #tpu.memory_space<vmem>>, vector<16x32xf32>
    tpu.vector_store %arg14[%c0_6, %c0_7], %6 {strides = array<i32>} : memref<16x32xf32, #tpu.memory_space<vmem>>, vector<16x32xf32>,
    %c0_8 = arith.constant 0 : index
    %c0_9 = arith.constant 0 : index
    %c0_10 = arith.constant 0 : index
    %8 = vector.load %arg2[%c0_8, %c0_9, %c0_10] : memref<1x16x32xf32, #tpu.memory_space<vmem>>, vector<1x16x32xf32>
    %9 = vector.shape_cast %8 : vector<1x16x32xf32> to vector<16x32xf32>
    %c0_11 = arith.constant 0 : index
    %c0_12 = arith.constant 0 : index
    %10 = vector.load %arg6[%c0_11, %c0_12] : memref<32x32xf32, #tpu.memory_space<vmem>>, vector<32x32xf32>
    %cst_13 = arith.constant dense<0.000000e+00> : vector<16x32xf32>
    %11 = tpu.matmul %9, %10, %cst_13 {dimension_numbers = #tpu.dot_dimension_numbers<[1], [0], [0], [1], [0, 0, 1, 1], [], []>} : vector<16x32xf32>, vector<32x32xf32>, vector<16x32xf32> -> vector<16x32xf32>
    %c0_14 = arith.constant 0 : index
    %c0_15 = arith.constant 0 : index
    %12 = vector.load %arg7[%c0_14, %c0_15] : memref<1x32xf32, #tpu.memory_space<vmem>>, vector<1x32xf32>
    %13 = vector.broadcast %12 : vector<1x32xf32> to vector<16x32xf32>
    %14 = arith.addf %11, %13 : vector<16x32xf32>
    %c0_16 = arith.constant 0 : index
    %c0_17 = arith.constant 0 : index
    %15 = vector.load %arg15[%c0_16, %c0_17] : memref<16x32xf32, #tpu.memory_space<vmem>>, vector<16x32xf32>
    tpu.vector_store %arg15[%c0_16, %c0_17], %14 {strides = array<i32>} : memref<16x32xf32, #tpu.memory_space<vmem>>, vector<16x32xf32>,
    %c0_18 = arith.constant 0 : index
    %c0_19 = arith.constant 0 : index
    %c0_20 = arith.constant 0 : index
    %16 = vector.load %arg3[%c0_18, %c0_19, %c0_20] : memref<1x16x32xf32, #tpu.memory_space<vmem>>, vector<1x16x32xf32>
    %17 = vector.shape_cast %16 : vector<1x16x32xf32> to vector<16x32xf32>
    %c0_21 = arith.constant 0 : index
    %c0_22 = arith.constant 0 : index
    %18 = vector.load %arg8[%c0_21, %c0_22] : memref<32x32xf32, #tpu.memory_space<vmem>>, vector<32x32xf32>
    %cst_23 = arith.constant dense<0.000000e+00> : vector<16x32xf32>
    %19 = tpu.matmul %17, %18, %cst_23 {dimension_numbers = #tpu.dot_dimension_numbers<[1], [0], [0], [1], [0, 0, 1, 1], [], []>} : vector<16x32xf32>, vector<32x32xf32>, vector<16x32xf32> -> vector<16x32xf32>
    %c0_24 = arith.constant 0 : index
    %c0_25 = arith.constant 0 : index
    %20 = vector.load %arg9[%c0_24, %c0_25] : memref<1x32xf32, #tpu.memory_space<vmem>>, vector<1x32xf32>
    %21 = vector.broadcast %20 : vector<1x32xf32> to vector<16x32xf32>
    %22 = arith.addf %19, %21 : vector<16x32xf32>
    %c0_26 = arith.constant 0 : index
    %c0_27 = arith.constant 0 : index
    %23 = vector.load %arg16[%c0_26, %c0_27] : memref<16x32xf32, #tpu.memory_space<vmem>>, vector<16x32xf32>
    tpu.vector_store %arg16[%c0_26, %c0_27], %22 {strides = array<i32>} : memref<16x32xf32, #tpu.memory_space<vmem>>, vector<16x32xf32>,
    %c0_28 = arith.constant 0 : index
    %c0_29 = arith.constant 0 : index
    %24 = vector.load %arg14[%c0_28, %c0_29] : memref<16x32xf32, #tpu.memory_space<vmem>>, vector<16x8xf32>
    %c0_30 = arith.constant 0 : index
    %c0_31 = arith.constant 0 : index
    %25 = vector.load %arg15[%c0_30, %c0_31] : memref<16x32xf32, #tpu.memory_space<vmem>>, vector<16x8xf32>
    %c0_32 = arith.constant 0 : index
    %c0_33 = arith.constant 0 : index
    %26 = vector.load %arg16[%c0_32, %c0_33] : memref<16x32xf32, #tpu.memory_space<vmem>>, vector<16x8xf32>
    %cst_34 = arith.constant dense<0.000000e+00> : vector<16x16xf32>
    %27 = tpu.matmul %24, %25, %cst_34 {dimension_numbers = #tpu.dot_dimension_numbers<[1], [1], [0], [0], [0, 0, 1, 0], [], []>} : vector<16x8xf32>, vector<16x8xf32>, vector<16x16xf32> -> vector<16x16xf32>
    %cst_35 = arith.constant 0.353553385 : f32
    %28 = vector.broadcast %cst_35 : f32 to vector<16x16xf32>
    %29 = arith.mulf %27, %28 : vector<16x16xf32>
    %cst_36 = arith.constant dense<0xFF800000> : vector<16xf32>
    %30 = vector.multi_reduction <maximumf>, %29, %cst_36 [1] : vector<16x16xf32> to vector<16xf32>
    %31 = vector.shape_cast %30 : vector<16xf32> to vector<16x1xf32>
    %32 = vector.broadcast %31 : vector<16x1xf32> to vector<16x16xf32>
    %33 = arith.subf %29, %32 : vector<16x16xf32>
    %34 = math.exp %33 : vector<16x16xf32>
    %cst_37 = arith.constant dense<0.000000e+00> : vector<16xf32>
    %35 = vector.multi_reduction <add>, %34, %cst_37 [1] : vector<16x16xf32> to vector<16xf32>
    %36 = vector.shape_cast %35 : vector<16xf32> to vector<16x1xf32>
    %cst_38 = arith.constant 1.00000095 : f32
    %37 = vector.broadcast %cst_38 : f32 to vector<16x1xf32>
    %38 = arith.mulf %36, %37 : vector<16x1xf32>
    %39 = tpu.reciprocal %38 {approx = true} : vector<16x1xf32> -> vector<16x1xf32>
    %40 = vector.broadcast %39 : vector<16x1xf32> to vector<16x16xf32>
    %41 = arith.mulf %34, %40 : vector<16x16xf32>
    %c0_39 = arith.constant 0 : index
    %c0_40 = arith.constant 0 : index
    %c0_41 = arith.constant 0 : index
    %c0_42 = arith.constant 0 : index
    %42 = vector.load %arg13[%c0_39, %c0_40, %c0_41, %c0_42] : memref<1x4x16x16xf32, #tpu.memory_space<vmem>>, vector<1x1x16x16xf32>
    %43 = vector.shape_cast %42 : vector<1x1x16x16xf32> to vector<16x16xf32>
    %44 = vector.shape_cast %41 : vector<16x16xf32> to vector<1x1x16x16xf32>
    tpu.vector_store %arg13[%c0_39, %c0_40, %c0_41, %c0_42], %44 {strides = array<i32>} : memref<1x4x16x16xf32, #tpu.memory_space<vmem>>, vector<1x1x16x16xf32>,
    %cst_43 = arith.constant dense<0.000000e+00> : vector<16x8xf32>
    %45 = tpu.matmul %41, %26, %cst_43 {dimension_numbers = #tpu.dot_dimension_numbers<[1], [0], [0], [1], [0, 0, 1, 1], [], []>} : vector<16x16xf32>, vector<16x8xf32>, vector<16x8xf32> -> vector<16x8xf32>
    %c0_44 = arith.constant 0 : index
    %c0_45 = arith.constant 0 : index
    %46 = vector.load %arg17[%c0_44, %c0_45] : memref<16x32xf32, #tpu.memory_space<vmem>>, vector<16x8xf32>
    tpu.vector_store %arg17[%c0_44, %c0_45], %45 {strides = array<i32>} : memref<16x32xf32, #tpu.memory_space<vmem>>, vector<16x8xf32>,
    %c0_46 = arith.constant 0 : index
    %c8 = arith.constant 8 : index
    %47 = vector.load %arg14[%c0_46, %c8] : memref<16x32xf32, #tpu.memory_space<vmem>>, vector<16x8xf32>
    %c0_47 = arith.constant 0 : index
    %c8_48 = arith.constant 8 : index
    %48 = vector.load %arg15[%c0_47, %c8_48] : memref<16x32xf32, #tpu.memory_space<vmem>>, vector<16x8xf32>
    %c0_49 = arith.constant 0 : index
    %c8_50 = arith.constant 8 : index
    %49 = vector.load %arg16[%c0_49, %c8_50] : memref<16x32xf32, #tpu.memory_space<vmem>>, vector<16x8xf32>
    %cst_51 = arith.constant dense<0.000000e+00> : vector<16x16xf32>
    %50 = tpu.matmul %47, %48, %cst_51 {dimension_numbers = #tpu.dot_dimension_numbers<[1], [1], [0], [0], [0, 0, 1, 0], [], []>} : vector<16x8xf32>, vector<16x8xf32>, vector<16x16xf32> -> vector<16x16xf32>
    %cst_52 = arith.constant 0.353553385 : f32
    %51 = vector.broadcast %cst_52 : f32 to vector<16x16xf32>
    %52 = arith.mulf %50, %51 : vector<16x16xf32>
    %cst_53 = arith.constant dense<0xFF800000> : vector<16xf32>
    %53 = vector.multi_reduction <maximumf>, %52, %cst_53 [1] : vector<16x16xf32> to vector<16xf32>
    %54 = vector.shape_cast %53 : vector<16xf32> to vector<16x1xf32>
    %55 = vector.broadcast %54 : vector<16x1xf32> to vector<16x16xf32>
    %56 = arith.subf %52, %55 : vector<16x16xf32>
    %57 = math.exp %56 : vector<16x16xf32>
    %cst_54 = arith.constant dense<0.000000e+00> : vector<16xf32>
    %58 = vector.multi_reduction <add>, %57, %cst_54 [1] : vector<16x16xf32> to vector<16xf32>
    %59 = vector.shape_cast %58 : vector<16xf32> to vector<16x1xf32>
    %cst_55 = arith.constant 1.00000095 : f32
    %60 = vector.broadcast %cst_55 : f32 to vector<16x1xf32>
    %61 = arith.mulf %59, %60 : vector<16x1xf32>
    %62 = tpu.reciprocal %61 {approx = true} : vector<16x1xf32> -> vector<16x1xf32>
    %63 = vector.broadcast %62 : vector<16x1xf32> to vector<16x16xf32>
    %64 = arith.mulf %57, %63 : vector<16x16xf32>
    %c0_56 = arith.constant 0 : index
    %c1 = arith.constant 1 : index
    %c0_57 = arith.constant 0 : index
    %c0_58 = arith.constant 0 : index
    %65 = vector.load %arg13[%c0_56, %c1, %c0_57, %c0_58] : memref<1x4x16x16xf32, #tpu.memory_space<vmem>>, vector<1x1x16x16xf32>
    %66 = vector.shape_cast %65 : vector<1x1x16x16xf32> to vector<16x16xf32>
    %67 = vector.shape_cast %64 : vector<16x16xf32> to vector<1x1x16x16xf32>
    tpu.vector_store %arg13[%c0_56, %c1, %c0_57, %c0_58], %67 {strides = array<i32>} : memref<1x4x16x16xf32, #tpu.memory_space<vmem>>, vector<1x1x16x16xf32>,
    %cst_59 = arith.constant dense<0.000000e+00> : vector<16x8xf32>
    %68 = tpu.matmul %64, %49, %cst_59 {dimension_numbers = #tpu.dot_dimension_numbers<[1], [0], [0], [1], [0, 0, 1, 1], [], []>} : vector<16x16xf32>, vector<16x8xf32>, vector<16x8xf32> -> vector<16x8xf32>
    %c0_60 = arith.constant 0 : index
    %c8_61 = arith.constant 8 : index
    %69 = vector.load %arg17[%c0_60, %c8_61] : memref<16x32xf32, #tpu.memory_space<vmem>>, vector<16x8xf32>
    tpu.vector_store %arg17[%c0_60, %c8_61], %68 {strides = array<i32>} : memref<16x32xf32, #tpu.memory_space<vmem>>, vector<16x8xf32>,
    %c0_62 = arith.constant 0 : index
    %c16 = arith.constant 16 : index
    %70 = vector.load %arg14[%c0_62, %c16] : memref<16x32xf32, #tpu.memory_space<vmem>>, vector<16x8xf32>
    %c0_63 = arith.constant 0 : index
    %c16_64 = arith.constant 16 : index
    %71 = vector.load %arg15[%c0_63, %c16_64] : memref<16x32xf32, #tpu.memory_space<vmem>>, vector<16x8xf32>
    %c0_65 = arith.constant 0 : index
    %c16_66 = arith.constant 16 : index
    %72 = vector.load %arg16[%c0_65, %c16_66] : memref<16x32xf32, #tpu.memory_space<vmem>>, vector<16x8xf32>
    %cst_67 = arith.constant dense<0.000000e+00> : vector<16x16xf32>
    %73 = tpu.matmul %70, %71, %cst_67 {dimension_numbers = #tpu.dot_dimension_numbers<[1], [1], [0], [0], [0, 0, 1, 0], [], []>} : vector<16x8xf32>, vector<16x8xf32>, vector<16x16xf32> -> vector<16x16xf32>
    %cst_68 = arith.constant 0.353553385 : f32
    %74 = vector.broadcast %cst_68 : f32 to vector<16x16xf32>
    %75 = arith.mulf %73, %74 : vector<16x16xf32>
    %cst_69 = arith.constant dense<0xFF800000> : vector<16xf32>
    %76 = vector.multi_reduction <maximumf>, %75, %cst_69 [1] : vector<16x16xf32> to vector<16xf32>
    %77 = vector.shape_cast %76 : vector<16xf32> to vector<16x1xf32>
    %78 = vector.broadcast %77 : vector<16x1xf32> to vector<16x16xf32>
    %79 = arith.subf %75, %78 : vector<16x16xf32>
    %80 = math.exp %79 : vector<16x16xf32>
    %cst_70 = arith.constant dense<0.000000e+00> : vector<16xf32>
    %81 = vector.multi_reduction <add>, %80, %cst_70 [1] : vector<16x16xf32> to vector<16xf32>
    %82 = vector.shape_cast %81 : vector<16xf32> to vector<16x1xf32>
    %cst_71 = arith.constant 1.00000095 : f32
    %83 = vector.broadcast %cst_71 : f32 to vector<16x1xf32>
    %84 = arith.mulf %82, %83 : vector<16x1xf32>
    %85 = tpu.reciprocal %84 {approx = true} : vector<16x1xf32> -> vector<16x1xf32>
    %86 = vector.broadcast %85 : vector<16x1xf32> to vector<16x16xf32>
    %87 = arith.mulf %80, %86 : vector<16x16xf32>
    %c0_72 = arith.constant 0 : index
    %c2 = arith.constant 2 : index
    %c0_73 = arith.constant 0 : index
    %c0_74 = arith.constant 0 : index
    %88 = vector.load %arg13[%c0_72, %c2, %c0_73, %c0_74] : memref<1x4x16x16xf32, #tpu.memory_space<vmem>>, vector<1x1x16x16xf32>
    %89 = vector.shape_cast %88 : vector<1x1x16x16xf32> to vector<16x16xf32>
    %90 = vector.shape_cast %87 : vector<16x16xf32> to vector<1x1x16x16xf32>
    tpu.vector_store %arg13[%c0_72, %c2, %c0_73, %c0_74], %90 {strides = array<i32>} : memref<1x4x16x16xf32, #tpu.memory_space<vmem>>, vector<1x1x16x16xf32>,
    %cst_75 = arith.constant dense<0.000000e+00> : vector<16x8xf32>
    %91 = tpu.matmul %87, %72, %cst_75 {dimension_numbers = #tpu.dot_dimension_numbers<[1], [0], [0], [1], [0, 0, 1, 1], [], []>} : vector<16x16xf32>, vector<16x8xf32>, vector<16x8xf32> -> vector<16x8xf32>
    %c0_76 = arith.constant 0 : index
    %c16_77 = arith.constant 16 : index
    %92 = vector.load %arg17[%c0_76, %c16_77] : memref<16x32xf32, #tpu.memory_space<vmem>>, vector<16x8xf32>
    tpu.vector_store %arg17[%c0_76, %c16_77], %91 {strides = array<i32>} : memref<16x32xf32, #tpu.memory_space<vmem>>, vector<16x8xf32>,
    %c0_78 = arith.constant 0 : index
    %c24 = arith.constant 24 : index
    %93 = vector.load %arg14[%c0_78, %c24] : memref<16x32xf32, #tpu.memory_space<vmem>>, vector<16x8xf32>
    %c0_79 = arith.constant 0 : index
    %c24_80 = arith.constant 24 : index
    %94 = vector.load %arg15[%c0_79, %c24_80] : memref<16x32xf32, #tpu.memory_space<vmem>>, vector<16x8xf32>
    %c0_81 = arith.constant 0 : index
    %c24_82 = arith.constant 24 : index
    %95 = vector.load %arg16[%c0_81, %c24_82] : memref<16x32xf32, #tpu.memory_space<vmem>>, vector<16x8xf32>
    %cst_83 = arith.constant dense<0.000000e+00> : vector<16x16xf32>
    %96 = tpu.matmul %93, %94, %cst_83 {dimension_numbers = #tpu.dot_dimension_numbers<[1], [1], [0], [0], [0, 0, 1, 0], [], []>} : vector<16x8xf32>, vector<16x8xf32>, vector<16x16xf32> -> vector<16x16xf32>
    %cst_84 = arith.constant 0.353553385 : f32
    %97 = vector.broadcast %cst_84 : f32 to vector<16x16xf32>
    %98 = arith.mulf %96, %97 : vector<16x16xf32>
    %cst_85 = arith.constant dense<0xFF800000> : vector<16xf32>
    %99 = vector.multi_reduction <maximumf>, %98, %cst_85 [1] : vector<16x16xf32> to vector<16xf32>
    %100 = vector.shape_cast %99 : vector<16xf32> to vector<16x1xf32>
    %101 = vector.broadcast %100 : vector<16x1xf32> to vector<16x16xf32>
    %102 = arith.subf %98, %101 : vector<16x16xf32>
    %103 = math.exp %102 : vector<16x16xf32>
    %cst_86 = arith.constant dense<0.000000e+00> : vector<16xf32>
    %104 = vector.multi_reduction <add>, %103, %cst_86 [1] : vector<16x16xf32> to vector<16xf32>
    %105 = vector.shape_cast %104 : vector<16xf32> to vector<16x1xf32>
    %cst_87 = arith.constant 1.00000095 : f32
    %106 = vector.broadcast %cst_87 : f32 to vector<16x1xf32>
    %107 = arith.mulf %105, %106 : vector<16x1xf32>
    %108 = tpu.reciprocal %107 {approx = true} : vector<16x1xf32> -> vector<16x1xf32>
    %109 = vector.broadcast %108 : vector<16x1xf32> to vector<16x16xf32>
    %110 = arith.mulf %103, %109 : vector<16x16xf32>
    %c0_88 = arith.constant 0 : index
    %c3 = arith.constant 3 : index
    %c0_89 = arith.constant 0 : index
    %c0_90 = arith.constant 0 : index
    %111 = vector.load %arg13[%c0_88, %c3, %c0_89, %c0_90] : memref<1x4x16x16xf32, #tpu.memory_space<vmem>>, vector<1x1x16x16xf32>
    %112 = vector.shape_cast %111 : vector<1x1x16x16xf32> to vector<16x16xf32>
    %113 = vector.shape_cast %110 : vector<16x16xf32> to vector<1x1x16x16xf32>
    tpu.vector_store %arg13[%c0_88, %c3, %c0_89, %c0_90], %113 {strides = array<i32>} : memref<1x4x16x16xf32, #tpu.memory_space<vmem>>, vector<1x1x16x16xf32>,
    %cst_91 = arith.constant dense<0.000000e+00> : vector<16x8xf32>
    %114 = tpu.matmul %110, %95, %cst_91 {dimension_numbers = #tpu.dot_dimension_numbers<[1], [0], [0], [1], [0, 0, 1, 1], [], []>} : vector<16x16xf32>, vector<16x8xf32>, vector<16x8xf32> -> vector<16x8xf32>
    %c0_92 = arith.constant 0 : index
    %c24_93 = arith.constant 24 : index
    %115 = vector.load %arg17[%c0_92, %c24_93] : memref<16x32xf32, #tpu.memory_space<vmem>>, vector<16x8xf32>
    tpu.vector_store %arg17[%c0_92, %c24_93], %114 {strides = array<i32>} : memref<16x32xf32, #tpu.memory_space<vmem>>, vector<16x8xf32>,
    %c0_94 = arith.constant 0 : index
    %c0_95 = arith.constant 0 : index
    %116 = vector.load %arg17[%c0_94, %c0_95] : memref<16x32xf32, #tpu.memory_space<vmem>>, vector<16x32xf32>
    %c0_96 = arith.constant 0 : index
    %c0_97 = arith.constant 0 : index
    %117 = vector.load %arg10[%c0_96, %c0_97] : memref<32x32xf32, #tpu.memory_space<vmem>>, vector<32x32xf32>
    %cst_98 = arith.constant dense<0.000000e+00> : vector<16x32xf32>
    %118 = tpu.matmul %116, %117, %cst_98 {dimension_numbers = #tpu.dot_dimension_numbers<[1], [0], [0], [1], [0, 0, 1, 1], [], []>} : vector<16x32xf32>, vector<32x32xf32>, vector<16x32xf32> -> vector<16x32xf32>
    %c0_99 = arith.constant 0 : index
    %c0_100 = arith.constant 0 : index
    %119 = vector.load %arg11[%c0_99, %c0_100] : memref<1x32xf32, #tpu.memory_space<vmem>>, vector<1x32xf32>
    %120 = vector.broadcast %119 : vector<1x32xf32> to vector<16x32xf32>
    %121 = arith.addf %118, %120 : vector<16x32xf32>
    %c0_101 = arith.constant 0 : index
    %c0_102 = arith.constant 0 : index
    %c0_103 = arith.constant 0 : index
    %122 = vector.load %arg12[%c0_101, %c0_102, %c0_103] : memref<1x16x32xf32, #tpu.memory_space<vmem>>, vector<1x16x32xf32>
    %123 = vector.shape_cast %122 : vector<1x16x32xf32> to vector<16x32xf32>
    %124 = vector.shape_cast %121 : vector<16x32xf32> to vector<1x16x32xf32>
    tpu.vector_store %arg12[%c0_101, %c0_102, %c0_103], %124 {strides = array<i32>} : memref<1x16x32xf32, #tpu.memory_space<vmem>>, vector<1x16x32xf32>,
    return
  }
  func.func @transform_0(%arg0: i32) -> (i32, i32, i32) {
    %c0_i32 = arith.constant 0 : i32
    %c0_i32_0 = arith.constant 0 : i32
    %c0_i32_1 = arith.constant 0 : i32
    return %arg0, %c0_i32, %c0_i32_0 : i32, i32, i32
  }
  func.func @transform_1(%arg0: i32) -> (i32, i32, i32) {
    %c0_i32 = arith.constant 0 : i32
    %c0_i32_0 = arith.constant 0 : i32
    %c0_i32_1 = arith.constant 0 : i32
    return %arg0, %c0_i32, %c0_i32_0 : i32, i32, i32
  }
  func.func @transform_2(%arg0: i32) -> (i32, i32, i32) {
    %c0_i32 = arith.constant 0 : i32
    %c0_i32_0 = arith.constant 0 : i32
    %c0_i32_1 = arith.constant 0 : i32
    return %arg0, %c0_i32, %c0_i32_0 : i32, i32, i32
  }
  func.func @transform_3(%arg0: i32) -> (i32, i32) {
    %c0_i32 = arith.constant 0 : i32
    %c0_i32_0 = arith.constant 0 : i32
    %c0_i32_1 = arith.constant 0 : i32
    return %c0_i32, %c0_i32_0 : i32, i32
  }
  func.func @transform_4(%arg0: i32) -> (i32, i32) {
    %c0_i32 = arith.constant 0 : i32
    %c0_i32_0 = arith.constant 0 : i32
    %c0_i32_1 = arith.constant 0 : i32
    return %c0_i32, %c0_i32_0 : i32, i32
  }
  func.func @transform_5(%arg0: i32) -> (i32, i32) {
    %c0_i32 = arith.constant 0 : i32
    %c0_i32_0 = arith.constant 0 : i32
    %c0_i32_1 = arith.constant 0 : i32
    return %c0_i32, %c0_i32_0 : i32, i32
  }
  func.func @transform_6(%arg0: i32) -> (i32, i32) {
    %c0_i32 = arith.constant 0 : i32
    %c0_i32_0 = arith.constant 0 : i32
    %c0_i32_1 = arith.constant 0 : i32
    return %c0_i32, %c0_i32_0 : i32, i32
  }
  func.func @transform_7(%arg0: i32) -> (i32, i32) {
    %c0_i32 = arith.constant 0 : i32
    %c0_i32_0 = arith.constant 0 : i32
    %c0_i32_1 = arith.constant 0 : i32
    return %c0_i32, %c0_i32_0 : i32, i32
  }
  func.func @transform_8(%arg0: i32) -> (i32, i32) {
    %c0_i32 = arith.constant 0 : i32
    %c0_i32_0 = arith.constant 0 : i32
    %c0_i32_1 = arith.constant 0 : i32
    return %c0_i32, %c0_i32_0 : i32, i32
  }
  func.func @transform_9(%arg0: i32) -> (i32, i32) {
    %c0_i32 = arith.constant 0 : i32
    %c0_i32_0 = arith.constant 0 : i32
    %c0_i32_1 = arith.constant 0 : i32
    return %c0_i32, %c0_i32_0 : i32, i32
  }
  func.func @transform_10(%arg0: i32) -> (i32, i32) {
    %c0_i32 = arith.constant 0 : i32
    %c0_i32_0 = arith.constant 0 : i32
    %c0_i32_1 = arith.constant 0 : i32
    return %c0_i32, %c0_i32_0 : i32, i32
  }
  func.func @transform_11(%arg0: i32) -> (i32, i32, i32) {
    %c0_i32 = arith.constant 0 : i32
    %c0_i32_0 = arith.constant 0 : i32
    %c0_i32_1 = arith.constant 0 : i32
    return %arg0, %c0_i32, %c0_i32_0 : i32, i32, i32
  }
  func.func @transform_12(%arg0: i32) -> (i32, i32, i32, i32) {
    %c0_i32 = arith.constant 0 : i32
    %c0_i32_0 = arith.constant 0 : i32
    %c0_i32_1 = arith.constant 0 : i32
    %c0_i32_2 = arith.constant 0 : i32
    return %arg0, %c0_i32, %c0_i32_0, %c0_i32_1 : i32, i32, i32, i32
  }
}

</mosaic_0001>

<llo_original>
// kernel: tpu_custom_call.1
$region0: #{tpu_custom_call.1}
  #allocation0 [shape = 'u32[]', space=smem, size = 0x4, offset = 0x4, fixed_abs, tag = 'smem constant byte address 0x4 - core index']
  #allocation1 [shape = 'u32[144,128]{1,0:T(1,128)}', space=vmem, size = 0x12000, scoped, tag = 'internal scratch']
  #allocation2 [shape = 'f32[16,32]{1,0:T(8,128)}', space=vmem, size = 0x2000, scoped, tag = 'scratch operand']
  #allocation3 [shape = 'f32[16,32]{1,0:T(8,128)}', space=vmem, size = 0x2000, scoped, tag = 'scratch operand']
  #allocation4 [shape = 'f32[16,32]{1,0:T(8,128)}', space=vmem, size = 0x2000, scoped, tag = 'scratch operand']
  #allocation5 [shape = 'f32[16,32]{1,0:T(8,128)}', space=vmem, size = 0x2000, scoped, tag = 'scratch operand']
  %s0 = inlined_call_operand.hbm [shape: f32[2,16,32], index: 0, kind: input, shape index: {}]
  %s1 = inlined_call_operand.hbm [shape: f32[2,16,32], index: 1, kind: input, shape index: {}]
  %s2 = inlined_call_operand.hbm [shape: f32[2,16,32], index: 2, kind: input, shape index: {}]
  %s3 = inlined_call_operand.hbm [shape: f32[32,32], index: 3, kind: input, shape index: {}]
  %s4 = inlined_call_operand.vmem [shape: f32[1,32], index: 4, kind: input, shape index: {}]
  %s5 = inlined_call_operand.hbm [shape: f32[32,32], index: 5, kind: input, shape index: {}]
  %s6 = inlined_call_operand.vmem [shape: f32[1,32], index: 6, kind: input, shape index: {}]
  %s7 = inlined_call_operand.hbm [shape: f32[32,32], index: 7, kind: input, shape index: {}]
  %s8 = inlined_call_operand.hbm [shape: f32[1,32], index: 8, kind: input, shape index: {}]
  %s9 = inlined_call_operand.vmem [shape: f32[32,32], index: 9, kind: input, shape index: {}]
  %s10 = inlined_call_operand.vmem [shape: f32[1,32], index: 10, kind: input, shape index: {}]
  %s11 = inlined_call_operand.hbm [shape: f32[2,16,32], index: 11, kind: output, shape index: {0}]
  %s12 = inlined_call_operand.hbm [shape: f32[2,4,16,16], index: 12, kind: output, shape index: {1}]
  %13 = xla_tuple %s11, %s12
  %s14 = sld [smem:[#allocation0]]
  $region113: #{tpu_custom_call.1} parent=0
    _
  %s16 = ssub.s32 1, %s14
  %s17 = scalar_select 0, %s16, %s14
  $region1: #{tpu_custom_call.1} parent=0
    #allocation6 [shape = 'u8[16384]{0}', space=vmem, size = 0x4000, scoped, tag = 'input window, operand 0']
    #allocation7 [shape = 's32[2]{0}', space=sflag, size = 0x8, scoped, tag = 'scoped memory for tpu_custom_call.1']
    #allocation8 [shape = 's32[2]{0}', space=sflag, size = 0x8, scoped, tag = 'scoped memory for tpu_custom_call.1']
    #allocation9 [shape = 'u8[16384]{0}', space=vmem, size = 0x4000, scoped, tag = 'input window, operand 1']
    #allocation10 [shape = 's32[2]{0}', space=sflag, size = 0x8, scoped, tag = 'scoped memory for tpu_custom_call.1']
    #allocation11 [shape = 'u8[16384]{0}', space=vmem, size = 0x4000, scoped, tag = 'input window, operand 2']
    #allocation12 [shape = 'u8[16384]{0}', space=vmem, size = 0x4000, scoped, tag = 'input window, operand 3, single buffered']
    #allocation13 [shape = 's32[1]{0}', space=sflag, size = 0x4, scoped, tag = 'scoped memory for tpu_custom_call.1']
    #allocation14 [shape = 'u8[16384]{0}', space=vmem, size = 0x4000, scoped, tag = 'input window, operand 5, single buffered']
    #allocation15 [shape = 'u8[16384]{0}', space=vmem, size = 0x4000, scoped, tag = 'input window, operand 7, single buffered']
    #allocation16 [shape = 's32[1]{0}', space=sflag, size = 0x4, scoped, tag = 'scoped memory for tpu_custom_call.1']
    #allocation17 [shape = 'u8[512]{0}', space=vmem, size = 0x400, scoped, tag = 'input window, operand 8, single buffered']
    #allocation18 [shape = 'u8[16384]{0}', space=vmem, size = 0x4000, scoped, tag = 'output window, operand 0']
    #allocation19 [shape = 'u8[65536]{0}', space=vmem, size = 0x10000, scoped, tag = 'output window, operand 1']
    #allocation20 [shape = 's32[2]{0}', space=sflag, size = 0x8, scoped, tag = 'scoped memory for tpu_custom_call.1']
    %18 = vsyncpa [#allocation7], 0
    %s19 = scalar_lea.sflag [#allocation7], 1
    %20 = vsyncpa %s19, 0
    %21 = vsyncpa [#allocation10], 0
    %s22 = scalar_lea.sflag [#allocation10], 1
    %23 = vsyncpa %s22, 0
    %24 = vsyncpa [#allocation13], 0
    %25 = vsyncpa [#allocation16], 0
    %26 = vsyncpa [#allocation8], 0
    %s27 = scalar_lea.sflag [#allocation8], 1
    %28 = vsyncpa %s27, 0
    %29 = vsyncpa [#allocation20], 0
    %s30 = scalar_lea.sflag [#allocation20], 1
    %31 = vsyncpa %s30, 0
    loop: start=0, step=1, limit=4
    $region2: #{tpu_custom_call.1} parent=1 // loop_pre_header
      _
    $region3: #{tpu_custom_call.1} parent=1 // loop_header
      %s33 = sphi 0, %s37
      %p34 = scmp.ge.s32.totalorder %s33, 4
      %s43 = sphi 0, %s45
      %s46 = sphi 0, %s43
      %s47 = sphi 0, %s46
      %s63 = sphi 0, %s47
      %s69 = sphi 0, %s71
      %s72 = sphi 0, %s69
      %s73 = sphi 0, %s72
      %s89 = sphi 0, %s73
      %s95 = sphi 0, %s97
      %s98 = sphi 0, %s95
      %s99 = sphi 0, %s98
      %s115 = sphi 0, %s99
      %s119 = sphi 0, %s119
      %s121 = sphi 0, %s119
      %s122 = sphi 0, %s121
      %s136 = sphi 0, %s122
      %s140 = sphi 0, %s140
      %s142 = sphi 0, %s140
      %s143 = sphi 0, %s142
      %s157 = sphi 0, %s143
      %s161 = sphi 0, %s161
      %s163 = sphi 0, %s161
      %s164 = sphi 0, %s163
      %s178 = sphi 0, %s164
      %s182 = sphi 0, %s182
      %s184 = sphi 0, %s182
      %s185 = sphi 0, %s184
      %s199 = sphi 0, %s185
      %s203 = sphi 0, %s203
      %s205 = sphi 0, %s203
      %s206 = sphi 0, %s205
      %s220 = sphi 0, %s206
      %s224 = sphi 0, %s224
      %s226 = sphi 0, %s224
      %s227 = sphi 0, %s226
      %s241 = sphi 0, %s227
      %s245 = sphi 0, %s245
      %s247 = sphi 0, %s245
      %s248 = sphi 0, %s247
      %s262 = sphi 0, %s248
      %s266 = sphi 0, %s266
      %s268 = sphi 0, %s266
      %s269 = sphi 0, %s268
      %s283 = sphi 0, %s269
      %s289 = sphi 0, %s291
      %s292 = sphi 0, %s289
      %s293 = sphi 0, %s292
      %s309 = sphi 0, %s293
      %s315 = sphi 0, %s317
      %s318 = sphi 0, %s315
      %s319 = sphi 0, %s318
      %s335 = sphi 0, %s319
    $region4: #{tpu_custom_call.1} parent=1 // loop_header_branch
      %36 = sbr.rel (%p34) target = $region8
    $region5: #{tpu_custom_call.1} parent=1 // loop_body
      %s38 = ssub.s32 %s33, 1
      %s39 = ssub.s32 %s33, 2
      %s40 = sadd.s32 %s33, 1
      %s41 = ssub.s32 %s33, %s40
      %p42 = scmp.eq.s32.totalorder %s41, 0
      %s44 = sadd.s32 %s43, 1
      %s45 = scalar_select %p42, %s43, %s44
      %p48 = pneg %p42
      %p49 = scmp.eq.s32.totalorder %s33, 1
      %p50 = por %p48, %p49
      %p51 = scmp.ne.s32.totalorder %s43, %s46
      %p52 = scmp.eq.s32.totalorder %s33, 0
      %p53 = por %p51, %p52
      %p54 = scmp.ne.s32.totalorder %s43, %s46
      %p55 = scmp.eq.s32.totalorder %s38, 1
      %p56 = por %p54, %p55
      %p57 = scmp.ne.s32.totalorder %s46, %s47
      %p58 = scmp.eq.s32.totalorder %s38, 0
      %p59 = por %p57, %p58
      %p60 = scmp.ne.s32.totalorder %s46, %s47
      %p61 = scmp.eq.s32.totalorder %s39, 1
      %p62 = por %p60, %p61
      %p64 = scmp.ne.s32.totalorder %s47, %s63
      %p65 = scmp.eq.s32.totalorder %s39, 0
      %p66 = por %p64, %p65
      %s67 = ssub.s32 %s33, %s40
      %p68 = scmp.eq.s32.totalorder %s67, 0
      %s70 = sadd.s32 %s69, 1
      %s71 = scalar_select %p68, %s69, %s70
      %p74 = pneg %p68
      %p75 = scmp.eq.s32.totalorder %s33, 1
      %p76 = por %p74, %p75
      %p77 = scmp.ne.s32.totalorder %s69, %s72
      %p78 = scmp.eq.s32.totalorder %s33, 0
      %p79 = por %p77, %p78
      %p80 = scmp.ne.s32.totalorder %s69, %s72
      %p81 = scmp.eq.s32.totalorder %s38, 1
      %p82 = por %p80, %p81
      %p83 = scmp.ne.s32.totalorder %s72, %s73
      %p84 = scmp.eq.s32.totalorder %s38, 0
      %p85 = por %p83, %p84
      %p86 = scmp.ne.s32.totalorder %s72, %s73
      %p87 = scmp.eq.s32.totalorder %s39, 1
      %p88 = por %p86, %p87
      %p90 = scmp.ne.s32.totalorder %s73, %s89
      %p91 = scmp.eq.s32.totalorder %s39, 0
      %p92 = por %p90, %p91
      %s93 = ssub.s32 %s33, %s40
      %p94 = scmp.eq.s32.totalorder %s93, 0
      %s96 = sadd.s32 %s95, 1
      %s97 = scalar_select %p94, %s95, %s96
      %p100 = pneg %p94
      %p101 = scmp.eq.s32.totalorder %s33, 1
      %p102 = por %p100, %p101
      %p103 = scmp.ne.s32.totalorder %s95, %s98
      %p104 = scmp.eq.s32.totalorder %s33, 0
      %p105 = por %p103, %p104
      %p106 = scmp.ne.s32.totalorder %s95, %s98
      %p107 = scmp.eq.s32.totalorder %s38, 1
      %p108 = por %p106, %p107
      %p109 = scmp.ne.s32.totalorder %s98, %s99
      %p110 = scmp.eq.s32.totalorder %s38, 0
      %p111 = por %p109, %p110
      %p112 = scmp.ne.s32.totalorder %s98, %s99
      %p113 = scmp.eq.s32.totalorder %s39, 1
      %p114 = por %p112, %p113
      %p116 = scmp.ne.s32.totalorder %s99, %s115
      %p117 = scmp.eq.s32.totalorder %s39, 0
      %p118 = por %p116, %p117
      %s120 = sadd.s32 %s119, 1
      %p123 = scmp.eq.s32.totalorder %s33, 1
      %p124 = scmp.ne.s32.totalorder %s119, %s121
      %p125 = scmp.eq.s32.totalorder %s33, 0
      %p126 = por %p124, %p125
      %p127 = scmp.ne.s32.totalorder %s119, %s121
      %p128 = scmp.eq.s32.totalorder %s38, 1
      %p129 = por %p127, %p128
      %p130 = scmp.ne.s32.totalorder %s121, %s122
      %p131 = scmp.eq.s32.totalorder %s38, 0
      %p132 = por %p130, %p131
      %p133 = scmp.ne.s32.totalorder %s121, %s122
      %p134 = scmp.eq.s32.totalorder %s39, 1
      %p135 = por %p133, %p134
      %p137 = scmp.ne.s32.totalorder %s122, %s136
      %p138 = scmp.eq.s32.totalorder %s39, 0
      %p139 = por %p137, %p138
      %s141 = sadd.s32 %s140, 1
      %p144 = scmp.eq.s32.totalorder %s33, 1
      %p145 = scmp.ne.s32.totalorder %s140, %s142
      %p146 = scmp.eq.s32.totalorder %s33, 0
      %p147 = por %p145, %p146
      %p148 = scmp.ne.s32.totalorder %s140, %s142
      %p149 = scmp.eq.s32.totalorder %s38, 1
      %p150 = por %p148, %p149
      %p151 = scmp.ne.s32.totalorder %s142, %s143
      %p152 = scmp.eq.s32.totalorder %s38, 0
      %p153 = por %p151, %p152
      %p154 = scmp.ne.s32.totalorder %s142, %s143
      %p155 = scmp.eq.s32.totalorder %s39, 1
      %p156 = por %p154, %p155
      %p158 = scmp.ne.s32.totalorder %s143, %s157
      %p159 = scmp.eq.s32.totalorder %s39, 0
      %p160 = por %p158, %p159
      %s162 = sadd.s32 %s161, 1
      %p165 = scmp.eq.s32.totalorder %s33, 1
      %p166 = scmp.ne.s32.totalorder %s161, %s163
      %p167 = scmp.eq.s32.totalorder %s33, 0
      %p168 = por %p166, %p167
      %p169 = scmp.ne.s32.totalorder %s161, %s163
      %p170 = scmp.eq.s32.totalorder %s38, 1
      %p171 = por %p169, %p170
      %p172 = scmp.ne.s32.totalorder %s163, %s164
      %p173 = scmp.eq.s32.totalorder %s38, 0
      %p174 = por %p172, %p173
      %p175 = scmp.ne.s32.totalorder %s163, %s164
      %p176 = scmp.eq.s32.totalorder %s39, 1
      %p177 = por %p175, %p176
      %p179 = scmp.ne.s32.totalorder %s164, %s178
      %p180 = scmp.eq.s32.totalorder %s39, 0
      %p181 = por %p179, %p180
      %s183 = sadd.s32 %s182, 1
      %p186 = scmp.eq.s32.totalorder %s33, 1
      %p187 = scmp.ne.s32.totalorder %s182, %s184
      %p188 = scmp.eq.s32.totalorder %s33, 0
      %p189 = por %p187, %p188
      %p190 = scmp.ne.s32.totalorder %s182, %s184
      %p191 = scmp.eq.s32.totalorder %s38, 1
      %p192 = por %p190, %p191
      %p193 = scmp.ne.s32.totalorder %s184, %s185
      %p194 = scmp.eq.s32.totalorder %s38, 0
      %p195 = por %p193, %p194
      %p196 = scmp.ne.s32.totalorder %s184, %s185
      %p197 = scmp.eq.s32.totalorder %s39, 1
      %p198 = por %p196, %p197
      %p200 = scmp.ne.s32.totalorder %s185, %s199
      %p201 = scmp.eq.s32.totalorder %s39, 0
      %p202 = por %p200, %p201
      %s204 = sadd.s32 %s203, 1
      %p207 = scmp.eq.s32.totalorder %s33, 1
      %p208 = scmp.ne.s32.totalorder %s203, %s205
      %p209 = scmp.eq.s32.totalorder %s33, 0
      %p210 = por %p208, %p209
      %p211 = scmp.ne.s32.totalorder %s203, %s205
      %p212 = scmp.eq.s32.totalorder %s38, 1
      %p213 = por %p211, %p212
      %p214 = scmp.ne.s32.totalorder %s205, %s206
      %p215 = scmp.eq.s32.totalorder %s38, 0
      %p216 = por %p214, %p215
      %p217 = scmp.ne.s32.totalorder %s205, %s206
      %p218 = scmp.eq.s32.totalorder %s39, 1
      %p219 = por %p217, %p218
      %p221 = scmp.ne.s32.totalorder %s206, %s220
      %p222 = scmp.eq.s32.totalorder %s39, 0
      %p223 = por %p221, %p222
      %s225 = sadd.s32 %s224, 1
      %p228 = scmp.eq.s32.totalorder %s33, 1
      %p229 = scmp.ne.s32.totalorder %s224, %s226
      %p230 = scmp.eq.s32.totalorder %s33, 0
      %p231 = por %p229, %p230
      %p232 = scmp.ne.s32.totalorder %s224, %s226
      %p233 = scmp.eq.s32.totalorder %s38, 1
      %p234 = por %p232, %p233
      %p235 = scmp.ne.s32.totalorder %s226, %s227
      %p236 = scmp.eq.s32.totalorder %s38, 0
      %p237 = por %p235, %p236
      %p238 = scmp.ne.s32.totalorder %s226, %s227
      %p239 = scmp.eq.s32.totalorder %s39, 1
      %p240 = por %p238, %p239
      %p242 = scmp.ne.s32.totalorder %s227, %s241
      %p243 = scmp.eq.s32.totalorder %s39, 0
      %p244 = por %p242, %p243
      %s246 = sadd.s32 %s245, 1
      %p249 = scmp.eq.s32.totalorder %s33, 1
      %p250 = scmp.ne.s32.totalorder %s245, %s247
      %p251 = scmp.eq.s32.totalorder %s33, 0
      %p252 = por %p250, %p251
      %p253 = scmp.ne.s32.totalorder %s245, %s247
      %p254 = scmp.eq.s32.totalorder %s38, 1
      %p255 = por %p253, %p254
      %p256 = scmp.ne.s32.totalorder %s247, %s248
      %p257 = scmp.eq.s32.totalorder %s38, 0
      %p258 = por %p256, %p257
      %p259 = scmp.ne.s32.totalorder %s247, %s248
      %p260 = scmp.eq.s32.totalorder %s39, 1
      %p261 = por %p259, %p260
      %p263 = scmp.ne.s32.totalorder %s248, %s262
      %p264 = scmp.eq.s32.totalorder %s39, 0
      %p265 = por %p263, %p264
      %s267 = sadd.s32 %s266, 1
      %p270 = scmp.eq.s32.totalorder %s33, 1
      %p271 = scmp.ne.s32.totalorder %s266, %s268
      %p272 = scmp.eq.s32.totalorder %s33, 0
      %p273 = por %p271, %p272
      %p274 = scmp.ne.s32.totalorder %s266, %s268
      %p275 = scmp.eq.s32.totalorder %s38, 1
      %p276 = por %p274, %p275
      %p277 = scmp.ne.s32.totalorder %s268, %s269
      %p278 = scmp.eq.s32.totalorder %s38, 0
      %p279 = por %p277, %p278
      %p280 = scmp.ne.s32.totalorder %s268, %s269
      %p281 = scmp.eq.s32.totalorder %s39, 1
      %p282 = por %p280, %p281
      %p284 = scmp.ne.s32.totalorder %s269, %s283
      %p285 = scmp.eq.s32.totalorder %s39, 0
      %p286 = por %p284, %p285
      %s287 = ssub.s32 %s33, %s40
      %p288 = scmp.eq.s32.totalorder %s287, 0
      %s290 = sadd.s32 %s289, 1
      %s291 = scalar_select %p288, %s289, %s290
      %p294 = pneg %p288
      %p295 = scmp.eq.s32.totalorder %s33, 1
      %p296 = por %p294, %p295
      %p297 = scmp.ne.s32.totalorder %s289, %s292
      %p298 = scmp.eq.s32.totalorder %s33, 0
      %p299 = por %p297, %p298
      %p300 = scmp.ne.s32.totalorder %s289, %s292
      %p301 = scmp.eq.s32.totalorder %s38, 1
      %p302 = por %p300, %p301
      %p303 = scmp.ne.s32.totalorder %s292, %s293
      %p304 = scmp.eq.s32.totalorder %s38, 0
      %p305 = por %p303, %p304
      %p306 = scmp.ne.s32.totalorder %s292, %s293
      %p307 = scmp.eq.s32.totalorder %s39, 1
      %p308 = por %p306, %p307
      %p310 = scmp.ne.s32.totalorder %s293, %s309
      %p311 = scmp.eq.s32.totalorder %s39, 0
      %p312 = por %p310, %p311
      %s313 = ssub.s32 %s33, %s40
      %p314 = scmp.eq.s32.totalorder %s313, 0
      %s316 = sadd.s32 %s315, 1
      %s317 = scalar_select %p314, %s315, %s316
      %p320 = pneg %p314
      %p321 = scmp.eq.s32.totalorder %s33, 1
      %p322 = por %p320, %p321
      %p323 = scmp.ne.s32.totalorder %s315, %s318
      %p324 = scmp.eq.s32.totalorder %s33, 0
      %p325 = por %p323, %p324
      %p326 = scmp.ne.s32.totalorder %s315, %s318
      %p327 = scmp.eq.s32.totalorder %s38, 1
      %p328 = por %p326, %p327
      %p329 = scmp.ne.s32.totalorder %s318, %s319
      %p330 = scmp.eq.s32.totalorder %s38, 0
      %p331 = por %p329, %p330
      %p332 = scmp.ne.s32.totalorder %s318, %s319
      %p333 = scmp.eq.s32.totalorder %s39, 1
      %p334 = por %p332, %p333
      %p336 = scmp.ne.s32.totalorder %s319, %s335
      %p337 = scmp.eq.s32.totalorder %s39, 0
      %p338 = por %p336, %p337
      %p339 = scmp.le.s32.totalorder 1, %s33
      %p340 = scmp.lt.s32.totalorder %s33, 3
      %p341 = pnand %p339, %p340
      %p342 = pneg %p341
      // Predicated region
      $region9: #{tpu_custom_call.1} parent=5 // pred_check
        _
      $region10: #{tpu_custom_call.1} parent=5 // pred_check_branch
        %344 = sbr.rel (%p341) target = $region12
      $region11: #{tpu_custom_call.1} parent=5 // pred_region
        %s345 = ssub.s32 %s33, 1
        // Predicated region
        $region13: #{tpu_custom_call.1} parent=11 // pred_check
          %p346 = pneg %p132
        $region14: #{tpu_custom_call.1} parent=11 // pred_check_branch
          %348 = sbr.rel (%p346) target = $region16
        $region15: #{tpu_custom_call.1} parent=11 // pred_region
          %s350 = ssub.s32 512, 512
          %351 = vsyncadd [#allocation13], %s350
          %s352 = sshll.u32 [#allocation12], 4
          %s353 = int_to_ptr.vmem [resolvable:$true] %s352
          %358 = dma.hbm_to_vmem [thread:$0]  %s3, 512, %s353, [#allocation13], 128, 128, 8
        $region16: #{tpu_custom_call.1} parent=11 // pred_fallthru
          _
        // Predicated region
        $region17: #{tpu_custom_call.1} parent=11 // pred_check
          %p359 = pneg %p153
        $region18: #{tpu_custom_call.1} parent=11 // pred_check_branch
          %361 = sbr.rel (%p359) target = $region20
        $region19: #{tpu_custom_call.1} parent=11 // pred_region
          _
        $region20: #{tpu_custom_call.1} parent=11 // pred_fallthru
          _
        // Predicated region
        $region21: #{tpu_custom_call.1} parent=11 // pred_check
          %p362 = pneg %p174
        $region22: #{tpu_custom_call.1} parent=11 // pred_check_branch
          %364 = sbr.rel (%p362) target = $region24
        $region23: #{tpu_custom_call.1} parent=11 // pred_region
          %s366 = ssub.s32 512, 512
          %367 = vsyncadd [#allocation13], %s366
          %s368 = sshll.u32 [#allocation14], 4
          %s369 = int_to_ptr.vmem [resolvable:$true] %s368
          %374 = dma.hbm_to_vmem [thread:$0]  %s5, 512, %s369, [#allocation13], 128, 128, 8
        $region24: #{tpu_custom_call.1} parent=11 // pred_fallthru
          _
        // Predicated region
        $region25: #{tpu_custom_call.1} parent=11 // pred_check
          %p375 = pneg %p195
        $region26: #{tpu_custom_call.1} parent=11 // pred_check_branch
          %377 = sbr.rel (%p375) target = $region28
        $region27: #{tpu_custom_call.1} parent=11 // pred_region
          _
        $region28: #{tpu_custom_call.1} parent=11 // pred_fallthru
          _
        // Predicated region
        $region29: #{tpu_custom_call.1} parent=11 // pred_check
          %p378 = pneg %p216
        $region30: #{tpu_custom_call.1} parent=11 // pred_check_branch
          %380 = sbr.rel (%p378) target = $region32
        $region31: #{tpu_custom_call.1} parent=11 // pred_region
          %s382 = ssub.s32 512, 512
          %383 = vsyncadd [#allocation16], %s382
          %s384 = sshll.u32 [#allocation15], 4
          %s385 = int_to_ptr.vmem [resolvable:$true] %s384
          %390 = dma.hbm_to_vmem [thread:$0]  %s7, 512, %s385, [#allocation16], 128, 128, 8
        $region32: #{tpu_custom_call.1} parent=11 // pred_fallthru
          _
        // Predicated region
        $region33: #{tpu_custom_call.1} parent=11 // pred_check
          %p391 = pneg %p237
        $region34: #{tpu_custom_call.1} parent=11 // pred_check_branch
          %393 = sbr.rel (%p391) target = $region36
        $region35: #{tpu_custom_call.1} parent=11 // pred_region
          %s395 = ssub.s32 16, 16
          %396 = vsyncadd [#allocation16], %s395
          %s398 = sshll.u32 [#allocation17], 4
          %s399 = int_to_ptr.vmem [resolvable:$true] %s398
          %401 = dma.hbm_to_vmem [thread:$0]  %s8, 16, %s399, [#allocation16]
        $region36: #{tpu_custom_call.1} parent=11 // pred_fallthru
          _
        // Predicated region
        $region37: #{tpu_custom_call.1} parent=11 // pred_check
          %p402 = pneg %p258
        $region38: #{tpu_custom_call.1} parent=11 // pred_check_branch
          %404 = sbr.rel (%p402) target = $region40
        $region39: #{tpu_custom_call.1} parent=11 // pred_region
          _
        $region40: #{tpu_custom_call.1} parent=11 // pred_fallthru
          _
        // Predicated region
        $region41: #{tpu_custom_call.1} parent=11 // pred_check
          %p405 = pneg %p279
        $region42: #{tpu_custom_call.1} parent=11 // pred_check_branch
          %407 = sbr.rel (%p405) target = $region44
        $region43: #{tpu_custom_call.1} parent=11 // pred_region
          _
        $region44: #{tpu_custom_call.1} parent=11 // pred_fallthru
          _
      $region12: #{tpu_custom_call.1} parent=5 // pred_fallthru
        _
      %p408 = scmp.lt.s32.totalorder %s33, 2
      // Predicated region
      $region45: #{tpu_custom_call.1} parent=5 // pred_check
        %p409 = pneg %p408
      $region46: #{tpu_custom_call.1} parent=5 // pred_check_branch
        %411 = sbr.rel (%p409) target = $region48
      $region47: #{tpu_custom_call.1} parent=5 // pred_region
        // Predicated region
        $region49: #{tpu_custom_call.1} parent=47 // pred_check
          %p412 = pneg %p53
        $region50: #{tpu_custom_call.1} parent=47 // pred_check_branch
          %414 = sbr.rel (%p412) target = $region52
        $region51: #{tpu_custom_call.1} parent=47 // pred_region
          %s415 = sand.u32 %s43, 1
          %s416 = scalar_lea.sflag [#allocation7], %s415
          %s417 = sand.u32 %s43, 1
          %s418 = smul.addr %s417, 16
          %s419 = scalar_lea.vmem [#allocation6], %s418
          %s421 = ssub.s32 256, 256
          %422 = vsyncadd %s416, %s421
          %s423 = smul.addr %s33, 2
          %s424 = smul.addr %s423, 128
          %s425 = scalar_lea.hbm %s0, %s424
          %s426 = sshll.u32 %s419, 4
          %s427 = int_to_ptr.vmem [resolvable:$true] %s426
          %432 = dma.hbm_to_vmem [thread:$0]  %s425, 256, %s427, %s416, 128, 128, 8
        $region52: #{tpu_custom_call.1} parent=47 // pred_fallthru
          _
        // Predicated region
        $region53: #{tpu_custom_call.1} parent=47 // pred_check
          %p433 = pneg %p79
        $region54: #{tpu_custom_call.1} parent=47 // pred_check_branch
          %435 = sbr.rel (%p433) target = $region56
        $region55: #{tpu_custom_call.1} parent=47 // pred_region
          %s436 = sand.u32 %s33, 1
          %s437 = scalar_lea.sflag [#allocation10], %s436
          %s438 = sand.u32 %s69, 1
          %s439 = smul.addr %s438, 16
          %s440 = scalar_lea.vmem [#allocation9], %s439
          %s442 = ssub.s32 256, 256
          %443 = vsyncadd %s437, %s442
          %s444 = smul.addr %s33, 2
          %s445 = smul.addr %s444, 128
          %s446 = scalar_lea.hbm %s1, %s445
          %s447 = sshll.u32 %s440, 4
          %s448 = int_to_ptr.vmem [resolvable:$true] %s447
          %453 = dma.hbm_to_vmem [thread:$0]  %s446, 256, %s448, %s437, 128, 128, 8
        $region56: #{tpu_custom_call.1} parent=47 // pred_fallthru
          _
        // Predicated region
        $region57: #{tpu_custom_call.1} parent=47 // pred_check
          %p454 = pneg %p105
        $region58: #{tpu_custom_call.1} parent=47 // pred_check_branch
          %456 = sbr.rel (%p454) target = $region60
        $region59: #{tpu_custom_call.1} parent=47 // pred_region
          %s457 = sand.u32 %s33, 1
          %s458 = scalar_lea.sflag [#allocation10], %s457
          %s459 = sand.u32 %s95, 1
          %s460 = smul.addr %s459, 16
          %s461 = scalar_lea.vmem [#allocation11], %s460
          %s463 = ssub.s32 256, 256
          %464 = vsyncadd %s458, %s463
          %s465 = smul.addr %s33, 2
          %s466 = smul.addr %s465, 128
          %s467 = scalar_lea.hbm %s2, %s466
          %s468 = sshll.u32 %s461, 4
          %s469 = int_to_ptr.vmem [resolvable:$true] %s468
          %474 = dma.hbm_to_vmem [thread:$0]  %s467, 256, %s469, %s458, 128, 128, 8
        $region60: #{tpu_custom_call.1} parent=47 // pred_fallthru
          _
      $region48: #{tpu_custom_call.1} parent=5 // pred_fallthru
        _
      %p475 = scmp.le.s32.totalorder 1, %s33
      %p476 = scmp.lt.s32.totalorder %s33, 3
      %p477 = pnand %p475, %p476
      %p478 = pneg %p477
      // Predicated region
      $region61: #{tpu_custom_call.1} parent=5 // pred_check
        _
      $region62: #{tpu_custom_call.1} parent=5 // pred_check_branch
        %480 = sbr.rel (%p477) target = $region64
      $region63: #{tpu_custom_call.1} parent=5 // pred_region
        %s481 = ssub.s32 %s33, 1
        %s482 = sand.u32 %s46, 1
        %s483 = scalar_lea.sflag [#allocation7], %s482
        %s484 = sand.u32 %s46, 1
        %s485 = smul.addr %s484, 16
        %s486 = scalar_lea.vmem [#allocation6], %s485
        // Predicated region
        $region65: #{tpu_custom_call.1} parent=63 // pred_check
          %p487 = pneg %p59
        $region66: #{tpu_custom_call.1} parent=63 // pred_check_branch
          %489 = sbr.rel (%p487) target = $region68
        $region67: #{tpu_custom_call.1} parent=63 // pred_region
          %490 = dma.done %s483, 256
        $region68: #{tpu_custom_call.1} parent=63 // pred_fallthru
          _
        %s491 = sand.u32 %s38, 1
        %s492 = scalar_lea.sflag [#allocation10], %s491
        %s493 = sand.u32 %s72, 1
        %s494 = smul.addr %s493, 16
        %s495 = scalar_lea.vmem [#allocation9], %s494
        // Predicated region
        $region69: #{tpu_custom_call.1} parent=63 // pred_check
          %p496 = pneg %p85
        $region70: #{tpu_custom_call.1} parent=63 // pred_check_branch
          %498 = sbr.rel (%p496) target = $region72
        $region71: #{tpu_custom_call.1} parent=63 // pred_region
          %499 = dma.done %s492, 256
        $region72: #{tpu_custom_call.1} parent=63 // pred_fallthru
          _
        %s500 = sand.u32 %s38, 1
        %s501 = scalar_lea.sflag [#allocation10], %s500
        %s502 = sand.u32 %s98, 1
        %s503 = smul.addr %s502, 16
        %s504 = scalar_lea.vmem [#allocation11], %s503
        // Predicated region
        $region73: #{tpu_custom_call.1} parent=63 // pred_check
          %p505 = pneg %p111
        $region74: #{tpu_custom_call.1} parent=63 // pred_check_branch
          %507 = sbr.rel (%p505) target = $region76
        $region75: #{tpu_custom_call.1} parent=63 // pred_region
          %508 = dma.done %s501, 256
        $region76: #{tpu_custom_call.1} parent=63 // pred_fallthru
          _
        // Predicated region
        $region77: #{tpu_custom_call.1} parent=63 // pred_check
          %p509 = pneg %p132
        $region78: #{tpu_custom_call.1} parent=63 // pred_check_branch
          %511 = sbr.rel (%p509) target = $region80
        $region79: #{tpu_custom_call.1} parent=63 // pred_region
          %512 = dma.done [#allocation13], 512
        $region80: #{tpu_custom_call.1} parent=63 // pred_fallthru
          _
        // Predicated region
        $region81: #{tpu_custom_call.1} parent=63 // pred_check
          %p513 = pneg %p174
        $region82: #{tpu_custom_call.1} parent=63 // pred_check_branch
          %515 = sbr.rel (%p513) target = $region84
        $region83: #{tpu_custom_call.1} parent=63 // pred_region
          %516 = dma.done [#allocation13], 512
        $region84: #{tpu_custom_call.1} parent=63 // pred_fallthru
          _
        // Predicated region
        $region85: #{tpu_custom_call.1} parent=63 // pred_check
          %p517 = pneg %p216
        $region86: #{tpu_custom_call.1} parent=63 // pred_check_branch
          %519 = sbr.rel (%p517) target = $region88
        $region87: #{tpu_custom_call.1} parent=63 // pred_region
          %520 = dma.done [#allocation16], 512
        $region88: #{tpu_custom_call.1} parent=63 // pred_fallthru
          _
        // Predicated region
        $region89: #{tpu_custom_call.1} parent=63 // pred_check
          %p521 = pneg %p237
        $region90: #{tpu_custom_call.1} parent=63 // pred_check_branch
          %523 = sbr.rel (%p521) target = $region92
        $region91: #{tpu_custom_call.1} parent=63 // pred_region
          %524 = dma.done [#allocation16], 16
        $region92: #{tpu_custom_call.1} parent=63 // pred_fallthru
          _
        %s525 = sand.u32 %s46, 1
        %s526 = scalar_lea.sflag [#allocation7], %s525
        %s527 = sand.u32 %s46, 1
        %s528 = smul.addr %s527, 16
        %s529 = scalar_lea.vmem [#allocation6], %s528
        %p530 = pneg %p59
        %p531 = pneg %p56
        %s532 = sand.u32 %s38, 1
        %s533 = scalar_lea.sflag [#allocation10], %s532
        %s534 = sand.u32 %s72, 1
        %s535 = smul.addr %s534, 16
        %s536 = scalar_lea.vmem [#allocation9], %s535
        %p537 = pneg %p85
        %p538 = pneg %p82
        %s539 = sand.u32 %s38, 1
        %s540 = scalar_lea.sflag [#allocation10], %s539
        %s541 = sand.u32 %s98, 1
        %s542 = smul.addr %s541, 16
        %s543 = scalar_lea.vmem [#allocation11], %s542
        %p544 = pneg %p111
        %p545 = pneg %p108
        %p546 = pneg %p132
        %p547 = pneg %p129
        %p548 = pneg %p153
        %p549 = pneg %p150
        %p550 = pneg %p174
        %p551 = pneg %p171
        %p552 = pneg %p195
        %p553 = pneg %p192
        %p554 = pneg %p216
        %p555 = pneg %p213
        %p556 = pneg %p237
        %p557 = pneg %p234
        %p558 = pneg %p258
        %p559 = pneg %p255
        %p560 = pneg %p279
        %p561 = pneg %p276
        %p562 = pneg %p305
        %p563 = pneg %p302
        %s564 = sand.u32 %s292, 1
        %s565 = scalar_lea.sflag [#allocation8], %s564
        %s566 = sand.u32 %s292, 1
        %s567 = smul.addr %s566, 16
        %s568 = scalar_lea.vmem [#allocation18], %s567
        %p569 = pneg %p331
        %p570 = pneg %p328
        %s571 = sand.u32 %s318, 1
        %s572 = scalar_lea.sflag [#allocation20], %s571
        %s573 = sand.u32 %s318, 1
        %s574 = smul.addr %s573, 64
        %s575 = scalar_lea.vmem [#allocation19], %s574
        %v576 = vld [vmem:[%s486] sm:$0xff]
        %v577 = vld [vmem:[%s486 + $0x8] sm:$0xff]
        %v578 = vld [vmem:[#allocation12] sm:$0xff]
        %v579 = vld [vmem:[#allocation12 + $0x8] sm:$0xff]
        %v580 = vld [vmem:[#allocation12 + $0x10] sm:$0xff]
        %v581 = vld [vmem:[#allocation12 + $0x18] sm:$0xff]
        %v582 = vld [vmem:[%s4] sm:$0x1]
        %v584 = vlaneseq
        %v585 = vshrl.u32 %v584, 7
        %v586 = vsub.s32 0, %v585
        %v587 = vrot.slane %v582, %v586
        %vm589 = vcmask 261120
        %v591 = vsel %vm589, %v576, 0
        %v594 = vsel %vm589, %v577, 0
        %596 = vmatprep.subr.mxu0 0.0
        %597 = vmatpush1.msra.mxu0 %v578
        %598 = vmatprep.subr.mxu0 0.0
        %599 = vmatpush1.msra.mxu0 %v579
        %600 = vmatprep.subr.mxu0 0.0
        %601 = vmatpush1.msra.mxu0 %v580
        %602 = vmatprep.subr.mxu0 0.0
        %603 = vmatpush1.msra.mxu0 %v581
        %604 = vmatprep.subr.mxu0 0.0
        %605 = vmatpush1.msra.mxu0 0.0
        %606 = vmatprep.subr.mxu0 0.0
        %607 = vmatpush1.msra.mxu0 0.0
        %608 = vmatprep.subr.mxu0 0.0
        %609 = vmatpush1.msra.mxu0 0.0
        %610 = vmatprep.subr.mxu0 0.0
        %611 = vmatpush1.msra.mxu0 0.0
        %612 = vmatprep.subr.mxu0 0.0
        %613 = vmatpush1.msra.mxu0 0.0
        %614 = vmatprep.subr.mxu0 0.0
        %615 = vmatpush1.msra.mxu0 0.0
        %616 = vmatprep.subr.mxu0 0.0
        %617 = vmatpush1.msra.mxu0 0.0
        %618 = vmatprep.subr.mxu0 0.0
        %619 = vmatpush1.msra.mxu0 0.0
        %620 = vmatprep.subr.mxu0 0.0
        %621 = vmatpush1.msra.mxu0 0.0
        %622 = vmatprep.subr.mxu0 0.0
        %623 = vmatpush1.msra.mxu0 0.0
        %624 = vmatprep.subr.mxu0 0.0
        %625 = vmatpush1.msra.mxu0 0.0
        %626 = vmatprep.subr.mxu0 0.0
        %627 = vmatpush1.msra.mxu0 0.0
        %628 = vmatprep.subr.mxu0 0.0
        %629 = vmatpush1.msra.mxu0 0.0
        %630 = vmatprep.subr.mxu0 0.0
        %631 = vmatpush1.msra.mxu0 0.0
        %632 = vmatprep.subr.mxu0 0.0
        %633 = vmatpush1.msra.mxu0 0.0
        %634 = vmatprep.subr.mxu0 0.0
        %635 = vmatpush1.msra.mxu0 0.0
        %636 = vmatprep.subr.mxu0 0.0
        %637 = vmatpush1.msra.mxu0 0.0
        %638 = vmatprep.subr.mxu0 0.0
        %639 = vmatpush1.msra.mxu0 0.0
        %640 = vmatprep.subr.mxu0 0.0
        %641 = vmatpush1.msra.mxu0 0.0
        %642 = vmatprep.subr.mxu0 0.0
        %643 = vmatpush1.msra.mxu0 0.0
        %644 = vmatprep.subr.mxu0 0.0
        %645 = vmatpush1.msra.mxu0 0.0
        %646 = vmatprep.subr.mxu0 0.0
        %647 = vmatpush1.msra.mxu0 0.0
        %648 = vmatprep.subr.mxu0 0.0
        %649 = vmatpush1.msra.mxu0 0.0
        %650 = vmatprep.subr.mxu0 0.0
        %651 = vmatpush1.msra.mxu0 0.0
        %652 = vmatprep.subr.mxu0 0.0
        %653 = vmatpush1.msra.mxu0 0.0
        %654 = vmatprep.subr.mxu0 0.0
        %655 = vmatpush1.msra.mxu0 0.0
        %656 = vmatprep.subr.mxu0 0.0
        %657 = vmatpush1.msra.mxu0 0.0
        %658 = vmatprep.subr.mxu0 0.0
        %659 = vmatpush1.msra.mxu0 0.0
        %660 = vmatprep.mubr.f32.mxu0 0.0
        %661 = vmatmul.mubr.f32.gmra.mrb[0].mxu0 %v591
        %v662 = vpop.f32.mrb[0].mxu0
        %v663 = vadd.f32 %v587, %v662
        %v664 = vpop.f32.mrb[0].mxu0
        %665 = vmatprep.mubr.f32.mxu0 0.0
        %666 = vmatmul.mubr.f32.gmra.mrb[0].mxu0 %v594
        %v667 = vpop.f32.mrb[0].mxu0
        %v668 = vadd.f32 %v587, %v667
        %v669 = vpop.f32.mrb[0].mxu0
        %670 = vdwg.mxu0
        %671 = vst.msk [vmem:[#allocation2] sm:$0xff] %vm589, %v663
        %672 = vst.msk [vmem:[#allocation2 + $0x8] sm:$0xff] %vm589, %v668
        %v673 = vld [vmem:[%s495] sm:$0xff]
        %v674 = vld [vmem:[%s495 + $0x8] sm:$0xff]
        %v675 = vld [vmem:[#allocation14] sm:$0xff]
        %v676 = vld [vmem:[#allocation14 + $0x8] sm:$0xff]
        %v677 = vld [vmem:[#allocation14 + $0x10] sm:$0xff]
        %v678 = vld [vmem:[#allocation14 + $0x18] sm:$0xff]
        %v679 = vld [vmem:[%s6] sm:$0x1]
        %v681 = vlaneseq
        %v682 = vshrl.u32 %v681, 7
        %v683 = vsub.s32 0, %v682
        %v684 = vrot.slane %v679, %v683
        %v687 = vsel %vm589, %v673, 0
        %v690 = vsel %vm589, %v674, 0
        %692 = vmatprep.subr.mxu0 0.0
        %693 = vmatpush1.msra.mxu0 %v675
        %694 = vmatprep.subr.mxu0 0.0
        %695 = vmatpush1.msra.mxu0 %v676
        %696 = vmatprep.subr.mxu0 0.0
        %697 = vmatpush1.msra.mxu0 %v677
        %698 = vmatprep.subr.mxu0 0.0
        %699 = vmatpush1.msra.mxu0 %v678
        %700 = vmatprep.subr.mxu0 0.0
        %701 = vmatpush1.msra.mxu0 0.0
        %702 = vmatprep.subr.mxu0 0.0
        %703 = vmatpush1.msra.mxu0 0.0
        %704 = vmatprep.subr.mxu0 0.0
        %705 = vmatpush1.msra.mxu0 0.0
        %706 = vmatprep.subr.mxu0 0.0
        %707 = vmatpush1.msra.mxu0 0.0
        %708 = vmatprep.subr.mxu0 0.0
        %709 = vmatpush1.msra.mxu0 0.0
        %710 = vmatprep.subr.mxu0 0.0
        %711 = vmatpush1.msra.mxu0 0.0
        %712 = vmatprep.subr.mxu0 0.0
        %713 = vmatpush1.msra.mxu0 0.0
        %714 = vmatprep.subr.mxu0 0.0
        %715 = vmatpush1.msra.mxu0 0.0
        %716 = vmatprep.subr.mxu0 0.0
        %717 = vmatpush1.msra.mxu0 0.0
        %718 = vmatprep.subr.mxu0 0.0
        %719 = vmatpush1.msra.mxu0 0.0
        %720 = vmatprep.subr.mxu0 0.0
        %721 = vmatpush1.msra.mxu0 0.0
        %722 = vmatprep.subr.mxu0 0.0
        %723 = vmatpush1.msra.mxu0 0.0
        %724 = vmatprep.subr.mxu0 0.0
        %725 = vmatpush1.msra.mxu0 0.0
        %726 = vmatprep.subr.mxu0 0.0
        %727 = vmatpush1.msra.mxu0 0.0
        %728 = vmatprep.subr.mxu0 0.0
        %729 = vmatpush1.msra.mxu0 0.0
        %730 = vmatprep.subr.mxu0 0.0
        %731 = vmatpush1.msra.mxu0 0.0
        %732 = vmatprep.subr.mxu0 0.0
        %733 = vmatpush1.msra.mxu0 0.0
        %734 = vmatprep.subr.mxu0 0.0
        %735 = vmatpush1.msra.mxu0 0.0
        %736 = vmatprep.subr.mxu0 0.0
        %737 = vmatpush1.msra.mxu0 0.0
        %738 = vmatprep.subr.mxu0 0.0
        %739 = vmatpush1.msra.mxu0 0.0
        %740 = vmatprep.subr.mxu0 0.0
        %741 = vmatpush1.msra.mxu0 0.0
        %742 = vmatprep.subr.mxu0 0.0
        %743 = vmatpush1.msra.mxu0 0.0
        %744 = vmatprep.subr.mxu0 0.0
        %745 = vmatpush1.msra.mxu0 0.0
        %746 = vmatprep.subr.mxu0 0.0
        %747 = vmatpush1.msra.mxu0 0.0
        %748 = vmatprep.subr.mxu0 0.0
        %749 = vmatpush1.msra.mxu0 0.0
        %750 = vmatprep.subr.mxu0 0.0
        %751 = vmatpush1.msra.mxu0 0.0
        %752 = vmatprep.subr.mxu0 0.0
        %753 = vmatpush1.msra.mxu0 0.0
        %754 = vmatprep.subr.mxu0 0.0
        %755 = vmatpush1.msra.mxu0 0.0
        %756 = vmatprep.mubr.f32.mxu0 0.0
        %757 = vmatmul.mubr.f32.gmra.mrb[0].mxu0 %v687
        %v758 = vpop.f32.mrb[0].mxu0
        %v759 = vadd.f32 %v684, %v758
        %v760 = vpop.f32.mrb[0].mxu0
        %761 = vmatprep.mubr.f32.mxu0 0.0
        %762 = vmatmul.mubr.f32.gmra.mrb[0].mxu0 %v690
        %v763 = vpop.f32.mrb[0].mxu0
        %v764 = vadd.f32 %v684, %v763
        %v765 = vpop.f32.mrb[0].mxu0
        %766 = vdwg.mxu0
        %767 = vst.msk [vmem:[#allocation3] sm:$0xff] %vm589, %v759
        %768 = vst.msk [vmem:[#allocation3 + $0x8] sm:$0xff] %vm589, %v764
        %v769 = vld [vmem:[%s504] sm:$0xff]
        %v770 = vld [vmem:[%s504 + $0x8] sm:$0xff]
        %v771 = vld [vmem:[#allocation15] sm:$0xff]
        %v772 = vld [vmem:[#allocation15 + $0x8] sm:$0xff]
        %v773 = vld [vmem:[#allocation15 + $0x10] sm:$0xff]
        %v774 = vld [vmem:[#allocation15 + $0x18] sm:$0xff]
        %v775 = vld [vmem:[#allocation17] sm:$0x1]
        %v777 = vlaneseq
        %v778 = vshrl.u32 %v777, 7
        %v779 = vsub.s32 0, %v778
        %v780 = vrot.slane %v775, %v779
        %v783 = vsel %vm589, %v769, 0
        %v786 = vsel %vm589, %v770, 0
        %788 = vmatprep.subr.mxu0 0.0
        %789 = vmatpush1.msra.mxu0 %v771
        %790 = vmatprep.subr.mxu0 0.0
        %791 = vmatpush1.msra.mxu0 %v772
        %792 = vmatprep.subr.mxu0 0.0
        %793 = vmatpush1.msra.mxu0 %v773
        %794 = vmatprep.subr.mxu0 0.0
        %795 = vmatpush1.msra.mxu0 %v774
        %796 = vmatprep.subr.mxu0 0.0
        %797 = vmatpush1.msra.mxu0 0.0
        %798 = vmatprep.subr.mxu0 0.0
        %799 = vmatpush1.msra.mxu0 0.0
        %800 = vmatprep.subr.mxu0 0.0
        %801 = vmatpush1.msra.mxu0 0.0
        %802 = vmatprep.subr.mxu0 0.0
        %803 = vmatpush1.msra.mxu0 0.0
        %804 = vmatprep.subr.mxu0 0.0
        %805 = vmatpush1.msra.mxu0 0.0
        %806 = vmatprep.subr.mxu0 0.0
        %807 = vmatpush1.msra.mxu0 0.0
        %808 = vmatprep.subr.mxu0 0.0
        %809 = vmatpush1.msra.mxu0 0.0
        %810 = vmatprep.subr.mxu0 0.0
        %811 = vmatpush1.msra.mxu0 0.0
        %812 = vmatprep.subr.mxu0 0.0
        %813 = vmatpush1.msra.mxu0 0.0
        %814 = vmatprep.subr.mxu0 0.0
        %815 = vmatpush1.msra.mxu0 0.0
        %816 = vmatprep.subr.mxu0 0.0
        %817 = vmatpush1.msra.mxu0 0.0
        %818 = vmatprep.subr.mxu0 0.0
        %819 = vmatpush1.msra.mxu0 0.0
        %820 = vmatprep.subr.mxu0 0.0
        %821 = vmatpush1.msra.mxu0 0.0
        %822 = vmatprep.subr.mxu0 0.0
        %823 = vmatpush1.msra.mxu0 0.0
        %824 = vmatprep.subr.mxu0 0.0
        %825 = vmatpush1.msra.mxu0 0.0
        %826 = vmatprep.subr.mxu0 0.0
        %827 = vmatpush1.msra.mxu0 0.0
        %828 = vmatprep.subr.mxu0 0.0
        %829 = vmatpush1.msra.mxu0 0.0
        %830 = vmatprep.subr.mxu0 0.0
        %831 = vmatpush1.msra.mxu0 0.0
        %832 = vmatprep.subr.mxu0 0.0
        %833 = vmatpush1.msra.mxu0 0.0
        %834 = vmatprep.subr.mxu0 0.0
        %835 = vmatpush1.msra.mxu0 0.0
        %836 = vmatprep.subr.mxu0 0.0
        %837 = vmatpush1.msra.mxu0 0.0
        %838 = vmatprep.subr.mxu0 0.0
        %839 = vmatpush1.msra.mxu0 0.0
        %840 = vmatprep.subr.mxu0 0.0
        %841 = vmatpush1.msra.mxu0 0.0
        %842 = vmatprep.subr.mxu0 0.0
        %843 = vmatpush1.msra.mxu0 0.0
        %844 = vmatprep.subr.mxu0 0.0
        %845 = vmatpush1.msra.mxu0 0.0
        %846 = vmatprep.subr.mxu0 0.0
        %847 = vmatpush1.msra.mxu0 0.0
        %848 = vmatprep.subr.mxu0 0.0
        %849 = vmatpush1.msra.mxu0 0.0
        %850 = vmatprep.subr.mxu0 0.0
        %851 = vmatpush1.msra.mxu0 0.0
        %852 = vmatprep.mubr.f32.mxu0 0.0
        %853 = vmatmul.mubr.f32.gmra.mrb[0].mxu0 %v783
        %v854 = vpop.f32.mrb[0].mxu0
        %v855 = vadd.f32 %v780, %v854
        %v856 = vpop.f32.mrb[0].mxu0
        %857 = vmatprep.mubr.f32.mxu0 0.0
        %858 = vmatmul.mubr.f32.gmra.mrb[0].mxu0 %v786
        %v859 = vpop.f32.mrb[0].mxu0
        %v860 = vadd.f32 %v780, %v859
        %v861 = vpop.f32.mrb[0].mxu0
        %862 = vdwg.mxu0
        %863 = vst.msk [vmem:[#allocation4] sm:$0xff] %vm589, %v855
        %864 = vst.msk [vmem:[#allocation4 + $0x8] sm:$0xff] %vm589, %v860
        %v865 = vld [vmem:[#allocation2] sm:$0xff]
        %v866 = vld [vmem:[#allocation2 + $0x8] sm:$0xff]
        %v867 = vld [vmem:[#allocation3] sm:$0xff]
        %v868 = vld [vmem:[#allocation3 + $0x8] sm:$0xff]
        %v869 = vld [vmem:[#allocation4] sm:$0xff]
        %v870 = vld [vmem:[#allocation4 + $0x8] sm:$0xff]
        %vm871 = vcmask 64512
        %v873 = vsel %vm871, %v865, 0
        %v876 = vsel %vm871, %v866, 0
        %v879 = vsel %vm871, %v867, 0
        %v882 = vsel %vm871, %v868, 0
        %884 = vmatprep.subr.mxu0 0.0
        %885 = vmatpush1.xpose.msra.mxu0 %v879
        %886 = vmatprep.subr.mxu0 0.0
        %887 = vmatpush1.xpose.msra.mxu0 %v882
        %888 = vmatprep.subr.mxu0 0.0
        %889 = vmatpush1.xpose.msra.mxu0 0.0
        %890 = vmatprep.subr.mxu0 0.0
        %891 = vmatpush1.xpose.msra.mxu0 0.0
        %892 = vmatprep.subr.mxu0 0.0
        %893 = vmatpush1.xpose.msra.mxu0 0.0
        %894 = vmatprep.subr.mxu0 0.0
        %895 = vmatpush1.xpose.msra.mxu0 0.0
        %896 = vmatprep.subr.mxu0 0.0
        %897 = vmatpush1.xpose.msra.mxu0 0.0
        %898 = vmatprep.subr.mxu0 0.0
        %899 = vmatpush1.xpose.msra.mxu0 0.0
        %900 = vmatprep.subr.mxu0 0.0
        %901 = vmatpush1.xpose.msra.mxu0 0.0
        %902 = vmatprep.subr.mxu0 0.0
        %903 = vmatpush1.xpose.msra.mxu0 0.0
        %904 = vmatprep.subr.mxu0 0.0
        %905 = vmatpush1.xpose.msra.mxu0 0.0
        %906 = vmatprep.subr.mxu0 0.0
        %907 = vmatpush1.xpose.msra.mxu0 0.0
        %908 = vmatprep.subr.mxu0 0.0
        %909 = vmatpush1.xpose.msra.mxu0 0.0
        %910 = vmatprep.subr.mxu0 0.0
        %911 = vmatpush1.xpose.msra.mxu0 0.0
        %912 = vmatprep.subr.mxu0 0.0
        %913 = vmatpush1.xpose.msra.mxu0 0.0
        %914 = vmatprep.subr.mxu0 0.0
        %915 = vmatpush1.xpose.msra.mxu0 0.0
        %916 = vmatprep.subr.mxu0 0.0
        %917 = vmatpush1.xpose.msra.mxu0 0.0
        %918 = vmatprep.subr.mxu0 0.0
        %919 = vmatpush1.xpose.msra.mxu0 0.0
        %920 = vmatprep.subr.mxu0 0.0
        %921 = vmatpush1.xpose.msra.mxu0 0.0
        %922 = vmatprep.subr.mxu0 0.0
        %923 = vmatpush1.xpose.msra.mxu0 0.0
        %924 = vmatprep.subr.mxu0 0.0
        %925 = vmatpush1.xpose.msra.mxu0 0.0
        %926 = vmatprep.subr.mxu0 0.0
        %927 = vmatpush1.xpose.msra.mxu0 0.0
        %928 = vmatprep.subr.mxu0 0.0
        %929 = vmatpush1.xpose.msra.mxu0 0.0
        %930 = vmatprep.subr.mxu0 0.0
        %931 = vmatpush1.xpose.msra.mxu0 0.0
        %932 = vmatprep.subr.mxu0 0.0
        %933 = vmatpush1.xpose.msra.mxu0 0.0
        %934 = vmatprep.subr.mxu0 0.0
        %935 = vmatpush1.xpose.msra.mxu0 0.0
        %936 = vmatprep.subr.mxu0 0.0
        %937 = vmatpush1.xpose.msra.mxu0 0.0
        %938 = vmatprep.subr.mxu0 0.0
        %939 = vmatpush1.xpose.msra.mxu0 0.0
        %940 = vmatprep.subr.mxu0 0.0
        %941 = vmatpush1.xpose.msra.mxu0 0.0
        %942 = vmatprep.subr.mxu0 0.0
        %943 = vmatpush1.xpose.msra.mxu0 0.0
        %944 = vmatprep.subr.mxu0 0.0
        %945 = vmatpush1.xpose.msra.mxu0 0.0
        %946 = vmatprep.subr.mxu0 0.0
        %947 = vmatpush1.xpose.msra.mxu0 0.0
        %948 = vmatprep.mubr.f32.mxu0 0.0
        %949 = vmatmul.mubr.f32.gmra.mrb[0].mxu0 %v873
        %v950 = vpop.f32.mrb[0].mxu0
        %v951 = vadd.f32 0.0, %v950
        %v952 = vpop.f32.mrb[0].mxu0
        %953 = vmatprep.mubr.f32.mxu0 0.0
        %954 = vmatmul.mubr.f32.gmra.mrb[0].mxu0 %v876
        %v955 = vpop.f32.mrb[0].mxu0
        %v956 = vadd.f32 0.0, %v955
        %v957 = vpop.f32.mrb[0].mxu0
        %958 = vdwg.mxu0
        %v959 = vmul.f32 %v951, 0.35355338
        %v960 = vmul.f32 %v956, 0.35355338
        %vm961 = vcmask 130048
        %v962 = vsel %vm961, %v959, -inf
        %963 = vmax.xlane.f32.xlu0 %v962
        %v964 = vpop.xlane.xlu0 %963
        %v965 = vsel %vm961, %v960, -inf
        %966 = vmax.xlane.f32.xlu0 %v965
        %v967 = vpop.xlane.xlu0 %966
        %v968 = vsub.f32 %v959, %v964
        %v969 = vsub.f32 %v960, %v967
        %v970 = vmul.f32 %v968, 1.442695
        %v971 = vpow.pop %v970
        %v972 = vmul.f32 %v969, 1.442695
        %v973 = vpow.pop %v972
        %v974 = vsel %vm961, %v971, 0.0
        %975 = vadd.xlane.f32.xlu0 %v974
        %v976 = vpop.xlane.xlu0 %975
        %v977 = vsel %vm961, %v973, 0.0
        %978 = vadd.xlane.f32.xlu0 %v977
        %v979 = vpop.xlane.xlu0 %978
        %v980 = vmul.f32 %v976, 1.000001
        %v981 = vmul.f32 %v979, 1.000001
        %v982 = vrcp.pop %v980
        %v983 = vrcp.pop %v981
        %v984 = vmul.f32 %v971, %v982
        %v985 = vmul.f32 %v973, %v983
        %986 = vst.msk [vmem:[%s575] sm:$0xff] %vm961, %v984
        %987 = vst.msk [vmem:[%s575 + $0x8] sm:$0xff] %vm961, %v985
        %v989 = vsel %vm961, %v984, 0
        %v992 = vsel %vm961, %v985, 0
        %994 = vmatprep.subr.mxu0 0.0
        %995 = vmatpush1.msra.mxu0 %v869
        %996 = vmatprep.subr.mxu0 0.0
        %997 = vmatpush1.msra.mxu0 %v870
        %998 = vmatprep.subr.mxu0 0.0
        %999 = vmatpush1.msra.mxu0 0.0
        %1000 = vmatprep.subr.mxu0 0.0
        %1001 = vmatpush1.msra.mxu0 0.0
        %1002 = vmatprep.subr.mxu0 0.0
        %1003 = vmatpush1.msra.mxu0 0.0
        %1004 = vmatprep.subr.mxu0 0.0
        %1005 = vmatpush1.msra.mxu0 0.0
        %1006 = vmatprep.subr.mxu0 0.0
        %1007 = vmatpush1.msra.mxu0 0.0
        %1008 = vmatprep.subr.mxu0 0.0
        %1009 = vmatpush1.msra.mxu0 0.0
        %1010 = vmatprep.subr.mxu0 0.0
        %1011 = vmatpush1.msra.mxu0 0.0
        %1012 = vmatprep.subr.mxu0 0.0
        %1013 = vmatpush1.msra.mxu0 0.0
        %1014 = vmatprep.subr.mxu0 0.0
        %1015 = vmatpush1.msra.mxu0 0.0
        %1016 = vmatprep.subr.mxu0 0.0
        %1017 = vmatpush1.msra.mxu0 0.0
        %1018 = vmatprep.subr.mxu0 0.0
        %1019 = vmatpush1.msra.mxu0 0.0
        %1020 = vmatprep.subr.mxu0 0.0
        %1021 = vmatpush1.msra.mxu0 0.0
        %1022 = vmatprep.subr.mxu0 0.0
        %1023 = vmatpush1.msra.mxu0 0.0
        %1024 = vmatprep.subr.mxu0 0.0
        %1025 = vmatpush1.msra.mxu0 0.0
        %1026 = vmatprep.subr.mxu0 0.0
        %1027 = vmatpush1.msra.mxu0 0.0
        %1028 = vmatprep.subr.mxu0 0.0
        %1029 = vmatpush1.msra.mxu0 0.0
        %1030 = vmatprep.subr.mxu0 0.0
        %1031 = vmatpush1.msra.mxu0 0.0
        %1032 = vmatprep.subr.mxu0 0.0
        %1033 = vmatpush1.msra.mxu0 0.0
        %1034 = vmatprep.subr.mxu0 0.0
        %1035 = vmatpush1.msra.mxu0 0.0
        %1036 = vmatprep.subr.mxu0 0.0
        %1037 = vmatpush1.msra.mxu0 0.0
        %1038 = vmatprep.subr.mxu0 0.0
        %1039 = vmatpush1.msra.mxu0 0.0
        %1040 = vmatprep.subr.mxu0 0.0
        %1041 = vmatpush1.msra.mxu0 0.0
        %1042 = vmatprep.subr.mxu0 0.0
        %1043 = vmatpush1.msra.mxu0 0.0
        %1044 = vmatprep.subr.mxu0 0.0
        %1045 = vmatpush1.msra.mxu0 0.0
        %1046 = vmatprep.subr.mxu0 0.0
        %1047 = vmatpush1.msra.mxu0 0.0
        %1048 = vmatprep.subr.mxu0 0.0
        %1049 = vmatpush1.msra.mxu0 0.0
        %1050 = vmatprep.subr.mxu0 0.0
        %1051 = vmatpush1.msra.mxu0 0.0
        %1052 = vmatprep.subr.mxu0 0.0
        %1053 = vmatpush1.msra.mxu0 0.0
        %1054 = vmatprep.subr.mxu0 0.0
        %1055 = vmatpush1.msra.mxu0 0.0
        %1056 = vmatprep.subr.mxu0 0.0
        %1057 = vmatpush1.msra.mxu0 0.0
        %1058 = vmatprep.mubr.f32.mxu0 0.0
        %1059 = vmatmul.mubr.f32.gmra.mrb[0].mxu0 %v989
        %v1060 = vpop.f32.mrb[0].mxu0
        %v1061 = vadd.f32 0.0, %v1060
        %v1062 = vpop.f32.mrb[0].mxu0
        %1063 = vmatprep.mubr.f32.mxu0 0.0
        %1064 = vmatmul.mubr.f32.gmra.mrb[0].mxu0 %v992
        %v1065 = vpop.f32.mrb[0].mxu0
        %v1066 = vadd.f32 0.0, %v1065
        %v1067 = vpop.f32.mrb[0].mxu0
        %1068 = vdwg.mxu0
        %1069 = vst.msk [vmem:[#allocation5] sm:$0xff] %vm871, %v1061
        %1070 = vst.msk [vmem:[#allocation5 + $0x8] sm:$0xff] %vm871, %v1066
        %v1071 = vld [vmem:[#allocation2] sm:$0xff]
        %v1072 = vld [vmem:[#allocation2 + $0x8] sm:$0xff]
        %v1073 = vld [vmem:[#allocation3] sm:$0xff]
        %v1074 = vld [vmem:[#allocation3 + $0x8] sm:$0xff]
        %v1075 = vld [vmem:[#allocation4] sm:$0xff]
        %v1076 = vld [vmem:[#allocation4 + $0x8] sm:$0xff]
        %1079 = vrot.lane.b32.xlu0 %v1071, 120
        %v1080 = vpop.permute.xlu0 %1079
        %1081 = vrot.lane.b32.xlu0 %v1072, 120
        %v1082 = vpop.permute.xlu0 %1081
        %1085 = vrot.lane.b32.xlu0 %v1073, 120
        %v1086 = vpop.permute.xlu0 %1085
        %1087 = vrot.lane.b32.xlu0 %v1074, 120
        %v1088 = vpop.permute.xlu0 %1087
        %v1089 = vsel %vm871, %v1080, 0
        %v1091 = vsel %vm871, %v1082, 0
        %v1093 = vsel %vm871, %v1086, 0
        %v1095 = vsel %vm871, %v1088, 0
        %1097 = vmatprep.subr.mxu0 0.0
        %1098 = vmatpush1.xpose.msra.mxu0 %v1093
        %1099 = vmatprep.subr.mxu0 0.0
        %1100 = vmatpush1.xpose.msra.mxu0 %v1095
        %1101 = vmatprep.subr.mxu0 0.0
        %1102 = vmatpush1.xpose.msra.mxu0 0.0
        %1103 = vmatprep.subr.mxu0 0.0
        %1104 = vmatpush1.xpose.msra.mxu0 0.0
        %1105 = vmatprep.subr.mxu0 0.0
        %1106 = vmatpush1.xpose.msra.mxu0 0.0
        %1107 = vmatprep.subr.mxu0 0.0
        %1108 = vmatpush1.xpose.msra.mxu0 0.0
        %1109 = vmatprep.subr.mxu0 0.0
        %1110 = vmatpush1.xpose.msra.mxu0 0.0
        %1111 = vmatprep.subr.mxu0 0.0
        %1112 = vmatpush1.xpose.msra.mxu0 0.0
        %1113 = vmatprep.subr.mxu0 0.0
        %1114 = vmatpush1.xpose.msra.mxu0 0.0
        %1115 = vmatprep.subr.mxu0 0.0
        %1116 = vmatpush1.xpose.msra.mxu0 0.0
        %1117 = vmatprep.subr.mxu0 0.0
        %1118 = vmatpush1.xpose.msra.mxu0 0.0
        %1119 = vmatprep.subr.mxu0 0.0
        %1120 = vmatpush1.xpose.msra.mxu0 0.0
        %1121 = vmatprep.subr.mxu0 0.0
        %1122 = vmatpush1.xpose.msra.mxu0 0.0
        %1123 = vmatprep.subr.mxu0 0.0
        %1124 = vmatpush1.xpose.msra.mxu0 0.0
        %1125 = vmatprep.subr.mxu0 0.0
        %1126 = vmatpush1.xpose.msra.mxu0 0.0
        %1127 = vmatprep.subr.mxu0 0.0
        %1128 = vmatpush1.xpose.msra.mxu0 0.0
        %1129 = vmatprep.subr.mxu0 0.0
        %1130 = vmatpush1.xpose.msra.mxu0 0.0
        %1131 = vmatprep.subr.mxu0 0.0
        %1132 = vmatpush1.xpose.msra.mxu0 0.0
        %1133 = vmatprep.subr.mxu0 0.0
        %1134 = vmatpush1.xpose.msra.mxu0 0.0
        %1135 = vmatprep.subr.mxu0 0.0
        %1136 = vmatpush1.xpose.msra.mxu0 0.0
        %1137 = vmatprep.subr.mxu0 0.0
        %1138 = vmatpush1.xpose.msra.mxu0 0.0
        %1139 = vmatprep.subr.mxu0 0.0
        %1140 = vmatpush1.xpose.msra.mxu0 0.0
        %1141 = vmatprep.subr.mxu0 0.0
        %1142 = vmatpush1.xpose.msra.mxu0 0.0
        %1143 = vmatprep.subr.mxu0 0.0
        %1144 = vmatpush1.xpose.msra.mxu0 0.0
        %1145 = vmatprep.subr.mxu0 0.0
        %1146 = vmatpush1.xpose.msra.mxu0 0.0
        %1147 = vmatprep.subr.mxu0 0.0
        %1148 = vmatpush1.xpose.msra.mxu0 0.0
        %1149 = vmatprep.subr.mxu0 0.0
        %1150 = vmatpush1.xpose.msra.mxu0 0.0
        %1151 = vmatprep.subr.mxu0 0.0
        %1152 = vmatpush1.xpose.msra.mxu0 0.0
        %1153 = vmatprep.subr.mxu0 0.0
        %1154 = vmatpush1.xpose.msra.mxu0 0.0
        %1155 = vmatprep.subr.mxu0 0.0
        %1156 = vmatpush1.xpose.msra.mxu0 0.0
        %1157 = vmatprep.subr.mxu0 0.0
        %1158 = vmatpush1.xpose.msra.mxu0 0.0
        %1159 = vmatprep.subr.mxu0 0.0
        %1160 = vmatpush1.xpose.msra.mxu0 0.0
        %1161 = vmatprep.mubr.f32.mxu0 0.0
        %1162 = vmatmul.mubr.f32.gmra.mrb[0].mxu0 %v1089
        %v1163 = vpop.f32.mrb[0].mxu0
        %v1164 = vadd.f32 0.0, %v1163
        %v1165 = vpop.f32.mrb[0].mxu0
        %1166 = vmatprep.mubr.f32.mxu0 0.0
        %1167 = vmatmul.mubr.f32.gmra.mrb[0].mxu0 %v1091
        %v1168 = vpop.f32.mrb[0].mxu0
        %v1169 = vadd.f32 0.0, %v1168
        %v1170 = vpop.f32.mrb[0].mxu0
        %1171 = vdwg.mxu0
        %v1172 = vmul.f32 %v1164, 0.35355338
        %v1173 = vmul.f32 %v1169, 0.35355338
        %v1174 = vsel %vm961, %v1172, -inf
        %1175 = vmax.xlane.f32.xlu0 %v1174
        %v1176 = vpop.xlane.xlu0 %1175
        %v1177 = vsel %vm961, %v1173, -inf
        %1178 = vmax.xlane.f32.xlu0 %v1177
        %v1179 = vpop.xlane.xlu0 %1178
        %v1180 = vsub.f32 %v1172, %v1176
        %v1181 = vsub.f32 %v1173, %v1179
        %v1182 = vmul.f32 %v1180, 1.442695
        %v1183 = vpow.pop %v1182
        %v1184 = vmul.f32 %v1181, 1.442695
        %v1185 = vpow.pop %v1184
        %v1186 = vsel %vm961, %v1183, 0.0
        %1187 = vadd.xlane.f32.xlu0 %v1186
        %v1188 = vpop.xlane.xlu0 %1187
        %v1189 = vsel %vm961, %v1185, 0.0
        %1190 = vadd.xlane.f32.xlu0 %v1189
        %v1191 = vpop.xlane.xlu0 %1190
        %v1192 = vmul.f32 %v1188, 1.000001
        %v1193 = vmul.f32 %v1191, 1.000001
        %v1194 = vrcp.pop %v1192
        %v1195 = vrcp.pop %v1193
        %v1196 = vmul.f32 %v1183, %v1194
        %v1197 = vmul.f32 %v1185, %v1195
        %s1198 = scalar_lea.vmem %s575, 16 [#allocation19]
        %1199 = vst.msk [vmem:[%s1198] sm:$0xff] %vm961, %v1196
        %1200 = vst.msk [vmem:[%s1198 + $0x8] sm:$0xff] %vm961, %v1197
        %1203 = vrot.lane.b32.xlu0 %v1075, 120
        %v1204 = vpop.permute.xlu0 %1203
        %1205 = vrot.lane.b32.xlu0 %v1076, 120
        %v1206 = vpop.permute.xlu0 %1205
        %v1210 = vsel %vm961, %v1196, 0
        %v1213 = vsel %vm961, %v1197, 0
        %1215 = vmatprep.subr.mxu0 0.0
        %1216 = vmatpush1.msra.mxu0 %v1204
        %1217 = vmatprep.subr.mxu0 0.0
        %1218 = vmatpush1.msra.mxu0 %v1206
        %1219 = vmatprep.subr.mxu0 0.0
        %1220 = vmatpush1.msra.mxu0 0.0
        %1221 = vmatprep.subr.mxu0 0.0
        %1222 = vmatpush1.msra.mxu0 0.0
        %1223 = vmatprep.subr.mxu0 0.0
        %1224 = vmatpush1.msra.mxu0 0.0
        %1225 = vmatprep.subr.mxu0 0.0
        %1226 = vmatpush1.msra.mxu0 0.0
        %1227 = vmatprep.subr.mxu0 0.0
        %1228 = vmatpush1.msra.mxu0 0.0
        %1229 = vmatprep.subr.mxu0 0.0
        %1230 = vmatpush1.msra.mxu0 0.0
        %1231 = vmatprep.subr.mxu0 0.0
        %1232 = vmatpush1.msra.mxu0 0.0
        %1233 = vmatprep.subr.mxu0 0.0
        %1234 = vmatpush1.msra.mxu0 0.0
        %1235 = vmatprep.subr.mxu0 0.0
        %1236 = vmatpush1.msra.mxu0 0.0
        %1237 = vmatprep.subr.mxu0 0.0
        %1238 = vmatpush1.msra.mxu0 0.0
        %1239 = vmatprep.subr.mxu0 0.0
        %1240 = vmatpush1.msra.mxu0 0.0
        %1241 = vmatprep.subr.mxu0 0.0
        %1242 = vmatpush1.msra.mxu0 0.0
        %1243 = vmatprep.subr.mxu0 0.0
        %1244 = vmatpush1.msra.mxu0 0.0
        %1245 = vmatprep.subr.mxu0 0.0
        %1246 = vmatpush1.msra.mxu0 0.0
        %1247 = vmatprep.subr.mxu0 0.0
        %1248 = vmatpush1.msra.mxu0 0.0
        %1249 = vmatprep.subr.mxu0 0.0
        %1250 = vmatpush1.msra.mxu0 0.0
        %1251 = vmatprep.subr.mxu0 0.0
        %1252 = vmatpush1.msra.mxu0 0.0
        %1253 = vmatprep.subr.mxu0 0.0
        %1254 = vmatpush1.msra.mxu0 0.0
        %1255 = vmatprep.subr.mxu0 0.0
        %1256 = vmatpush1.msra.mxu0 0.0
        %1257 = vmatprep.subr.mxu0 0.0
        %1258 = vmatpush1.msra.mxu0 0.0
        %1259 = vmatprep.subr.mxu0 0.0
        %1260 = vmatpush1.msra.mxu0 0.0
        %1261 = vmatprep.subr.mxu0 0.0
        %1262 = vmatpush1.msra.mxu0 0.0
        %1263 = vmatprep.subr.mxu0 0.0
        %1264 = vmatpush1.msra.mxu0 0.0
        %1265 = vmatprep.subr.mxu0 0.0
        %1266 = vmatpush1.msra.mxu0 0.0
        %1267 = vmatprep.subr.mxu0 0.0
        %1268 = vmatpush1.msra.mxu0 0.0
        %1269 = vmatprep.subr.mxu0 0.0
        %1270 = vmatpush1.msra.mxu0 0.0
        %1271 = vmatprep.subr.mxu0 0.0
        %1272 = vmatpush1.msra.mxu0 0.0
        %1273 = vmatprep.subr.mxu0 0.0
        %1274 = vmatpush1.msra.mxu0 0.0
        %1275 = vmatprep.subr.mxu0 0.0
        %1276 = vmatpush1.msra.mxu0 0.0
        %1277 = vmatprep.subr.mxu0 0.0
        %1278 = vmatpush1.msra.mxu0 0.0
        %1279 = vmatprep.mubr.f32.mxu0 0.0
        %1280 = vmatmul.mubr.f32.gmra.mrb[0].mxu0 %v1210
        %v1281 = vpop.f32.mrb[0].mxu0
        %v1282 = vadd.f32 0.0, %v1281
        %v1283 = vpop.f32.mrb[0].mxu0
        %1284 = vmatprep.mubr.f32.mxu0 0.0
        %1285 = vmatmul.mubr.f32.gmra.mrb[0].mxu0 %v1213
        %v1286 = vpop.f32.mrb[0].mxu0
        %v1287 = vadd.f32 0.0, %v1286
        %v1288 = vpop.f32.mrb[0].mxu0
        %1289 = vdwg.mxu0
        %1292 = vrot.lane.b32.xlu0 %v1282, 8
        %v1293 = vpop.permute.xlu0 %1292
        %1294 = vrot.lane.b32.xlu0 %v1287, 8
        %v1295 = vpop.permute.xlu0 %1294
        %vm1298 = vcmask 130112
        %1299 = vst.msk [vmem:[#allocation5] sm:$0xff] %vm1298, %v1293
        %1300 = vst.msk [vmem:[#allocation5 + $0x8] sm:$0xff] %vm1298, %v1295
        %v1301 = vld [vmem:[#allocation2] sm:$0xff]
        %v1302 = vld [vmem:[#allocation2 + $0x8] sm:$0xff]
        %v1303 = vld [vmem:[#allocation3] sm:$0xff]
        %v1304 = vld [vmem:[#allocation3 + $0x8] sm:$0xff]
        %v1305 = vld [vmem:[#allocation4] sm:$0xff]
        %v1306 = vld [vmem:[#allocation4 + $0x8] sm:$0xff]
        %1309 = vrot.lane.b32.xlu0 %v1301, 112
        %v1310 = vpop.permute.xlu0 %1309
        %1311 = vrot.lane.b32.xlu0 %v1302, 112
        %v1312 = vpop.permute.xlu0 %1311
        %1315 = vrot.lane.b32.xlu0 %v1303, 112
        %v1316 = vpop.permute.xlu0 %1315
        %1317 = vrot.lane.b32.xlu0 %v1304, 112
        %v1318 = vpop.permute.xlu0 %1317
        %v1319 = vsel %vm871, %v1310, 0
        %v1321 = vsel %vm871, %v1312, 0
        %v1323 = vsel %vm871, %v1316, 0
        %v1325 = vsel %vm871, %v1318, 0
        %1327 = vmatprep.subr.mxu0 0.0
        %1328 = vmatpush1.xpose.msra.mxu0 %v1323
        %1329 = vmatprep.subr.mxu0 0.0
        %1330 = vmatpush1.xpose.msra.mxu0 %v1325
        %1331 = vmatprep.subr.mxu0 0.0
        %1332 = vmatpush1.xpose.msra.mxu0 0.0
        %1333 = vmatprep.subr.mxu0 0.0
        %1334 = vmatpush1.xpose.msra.mxu0 0.0
        %1335 = vmatprep.subr.mxu0 0.0
        %1336 = vmatpush1.xpose.msra.mxu0 0.0
        %1337 = vmatprep.subr.mxu0 0.0
        %1338 = vmatpush1.xpose.msra.mxu0 0.0
        %1339 = vmatprep.subr.mxu0 0.0
        %1340 = vmatpush1.xpose.msra.mxu0 0.0
        %1341 = vmatprep.subr.mxu0 0.0
        %1342 = vmatpush1.xpose.msra.mxu0 0.0
        %1343 = vmatprep.subr.mxu0 0.0
        %1344 = vmatpush1.xpose.msra.mxu0 0.0
        %1345 = vmatprep.subr.mxu0 0.0
        %1346 = vmatpush1.xpose.msra.mxu0 0.0
        %1347 = vmatprep.subr.mxu0 0.0
        %1348 = vmatpush1.xpose.msra.mxu0 0.0
        %1349 = vmatprep.subr.mxu0 0.0
        %1350 = vmatpush1.xpose.msra.mxu0 0.0
        %1351 = vmatprep.subr.mxu0 0.0
        %1352 = vmatpush1.xpose.msra.mxu0 0.0
        %1353 = vmatprep.subr.mxu0 0.0
        %1354 = vmatpush1.xpose.msra.mxu0 0.0
        %1355 = vmatprep.subr.mxu0 0.0
        %1356 = vmatpush1.xpose.msra.mxu0 0.0
        %1357 = vmatprep.subr.mxu0 0.0
        %1358 = vmatpush1.xpose.msra.mxu0 0.0
        %1359 = vmatprep.subr.mxu0 0.0
        %1360 = vmatpush1.xpose.msra.mxu0 0.0
        %1361 = vmatprep.subr.mxu0 0.0
        %1362 = vmatpush1.xpose.msra.mxu0 0.0
        %1363 = vmatprep.subr.mxu0 0.0
        %1364 = vmatpush1.xpose.msra.mxu0 0.0
        %1365 = vmatprep.subr.mxu0 0.0
        %1366 = vmatpush1.xpose.msra.mxu0 0.0
        %1367 = vmatprep.subr.mxu0 0.0
        %1368 = vmatpush1.xpose.msra.mxu0 0.0
        %1369 = vmatprep.subr.mxu0 0.0
        %1370 = vmatpush1.xpose.msra.mxu0 0.0
        %1371 = vmatprep.subr.mxu0 0.0
        %1372 = vmatpush1.xpose.msra.mxu0 0.0
        %1373 = vmatprep.subr.mxu0 0.0
        %1374 = vmatpush1.xpose.msra.mxu0 0.0
        %1375 = vmatprep.subr.mxu0 0.0
        %1376 = vmatpush1.xpose.msra.mxu0 0.0
        %1377 = vmatprep.subr.mxu0 0.0
        %1378 = vmatpush1.xpose.msra.mxu0 0.0
        %1379 = vmatprep.subr.mxu0 0.0
        %1380 = vmatpush1.xpose.msra.mxu0 0.0
        %1381 = vmatprep.subr.mxu0 0.0
        %1382 = vmatpush1.xpose.msra.mxu0 0.0
        %1383 = vmatprep.subr.mxu0 0.0
        %1384 = vmatpush1.xpose.msra.mxu0 0.0
        %1385 = vmatprep.subr.mxu0 0.0
        %1386 = vmatpush1.xpose.msra.mxu0 0.0
        %1387 = vmatprep.subr.mxu0 0.0
        %1388 = vmatpush1.xpose.msra.mxu0 0.0
        %1389 = vmatprep.subr.mxu0 0.0
        %1390 = vmatpush1.xpose.msra.mxu0 0.0
        %1391 = vmatprep.mubr.f32.mxu0 0.0
        %1392 = vmatmul.mubr.f32.gmra.mrb[0].mxu0 %v1319
        %v1393 = vpop.f32.mrb[0].mxu0
        %v1394 = vadd.f32 0.0, %v1393
        %v1395 = vpop.f32.mrb[0].mxu0
        %1396 = vmatprep.mubr.f32.mxu0 0.0
        %1397 = vmatmul.mubr.f32.gmra.mrb[0].mxu0 %v1321
        %v1398 = vpop.f32.mrb[0].mxu0
        %v1399 = vadd.f32 0.0, %v1398
        %v1400 = vpop.f32.mrb[0].mxu0
        %1401 = vdwg.mxu0
        %v1402 = vmul.f32 %v1394, 0.35355338
        %v1403 = vmul.f32 %v1399, 0.35355338
        %v1404 = vsel %vm961, %v1402, -inf
        %1405 = vmax.xlane.f32.xlu0 %v1404
        %v1406 = vpop.xlane.xlu0 %1405
        %v1407 = vsel %vm961, %v1403, -inf
        %1408 = vmax.xlane.f32.xlu0 %v1407
        %v1409 = vpop.xlane.xlu0 %1408
        %v1410 = vsub.f32 %v1402, %v1406
        %v1411 = vsub.f32 %v1403, %v1409
        %v1412 = vmul.f32 %v1410, 1.442695
        %v1413 = vpow.pop %v1412
        %v1414 = vmul.f32 %v1411, 1.442695
        %v1415 = vpow.pop %v1414
        %v1416 = vsel %vm961, %v1413, 0.0
        %1417 = vadd.xlane.f32.xlu0 %v1416
        %v1418 = vpop.xlane.xlu0 %1417
        %v1419 = vsel %vm961, %v1415, 0.0
        %1420 = vadd.xlane.f32.xlu0 %v1419
        %v1421 = vpop.xlane.xlu0 %1420
        %v1422 = vmul.f32 %v1418, 1.000001
        %v1423 = vmul.f32 %v1421, 1.000001
        %v1424 = vrcp.pop %v1422
        %v1425 = vrcp.pop %v1423
        %v1426 = vmul.f32 %v1413, %v1424
        %v1427 = vmul.f32 %v1415, %v1425
        %s1428 = scalar_lea.vmem %s575, 32 [#allocation19]
        %1429 = vst.msk [vmem:[%s1428] sm:$0xff] %vm961, %v1426
        %1430 = vst.msk [vmem:[%s1428 + $0x8] sm:$0xff] %vm961, %v1427
        %1433 = vrot.lane.b32.xlu0 %v1305, 112
        %v1434 = vpop.permute.xlu0 %1433
        %1435 = vrot.lane.b32.xlu0 %v1306, 112
        %v1436 = vpop.permute.xlu0 %1435
        %v1440 = vsel %vm961, %v1426, 0
        %v1443 = vsel %vm961, %v1427, 0
        %1445 = vmatprep.subr.mxu0 0.0
        %1446 = vmatpush1.msra.mxu0 %v1434
        %1447 = vmatprep.subr.mxu0 0.0
        %1448 = vmatpush1.msra.mxu0 %v1436
        %1449 = vmatprep.subr.mxu0 0.0
        %1450 = vmatpush1.msra.mxu0 0.0
        %1451 = vmatprep.subr.mxu0 0.0
        %1452 = vmatpush1.msra.mxu0 0.0
        %1453 = vmatprep.subr.mxu0 0.0
        %1454 = vmatpush1.msra.mxu0 0.0
        %1455 = vmatprep.subr.mxu0 0.0
        %1456 = vmatpush1.msra.mxu0 0.0
        %1457 = vmatprep.subr.mxu0 0.0
        %1458 = vmatpush1.msra.mxu0 0.0
        %1459 = vmatprep.subr.mxu0 0.0
        %1460 = vmatpush1.msra.mxu0 0.0
        %1461 = vmatprep.subr.mxu0 0.0
        %1462 = vmatpush1.msra.mxu0 0.0
        %1463 = vmatprep.subr.mxu0 0.0
        %1464 = vmatpush1.msra.mxu0 0.0
        %1465 = vmatprep.subr.mxu0 0.0
        %1466 = vmatpush1.msra.mxu0 0.0
        %1467 = vmatprep.subr.mxu0 0.0
        %1468 = vmatpush1.msra.mxu0 0.0
        %1469 = vmatprep.subr.mxu0 0.0
        %1470 = vmatpush1.msra.mxu0 0.0
        %1471 = vmatprep.subr.mxu0 0.0
        %1472 = vmatpush1.msra.mxu0 0.0
        %1473 = vmatprep.subr.mxu0 0.0
        %1474 = vmatpush1.msra.mxu0 0.0
        %1475 = vmatprep.subr.mxu0 0.0
        %1476 = vmatpush1.msra.mxu0 0.0
        %1477 = vmatprep.subr.mxu0 0.0
        %1478 = vmatpush1.msra.mxu0 0.0
        %1479 = vmatprep.subr.mxu0 0.0
        %1480 = vmatpush1.msra.mxu0 0.0
        %1481 = vmatprep.subr.mxu0 0.0
        %1482 = vmatpush1.msra.mxu0 0.0
        %1483 = vmatprep.subr.mxu0 0.0
        %1484 = vmatpush1.msra.mxu0 0.0
        %1485 = vmatprep.subr.mxu0 0.0
        %1486 = vmatpush1.msra.mxu0 0.0
        %1487 = vmatprep.subr.mxu0 0.0
        %1488 = vmatpush1.msra.mxu0 0.0
        %1489 = vmatprep.subr.mxu0 0.0
        %1490 = vmatpush1.msra.mxu0 0.0
        %1491 = vmatprep.subr.mxu0 0.0
        %1492 = vmatpush1.msra.mxu0 0.0
        %1493 = vmatprep.subr.mxu0 0.0
        %1494 = vmatpush1.msra.mxu0 0.0
        %1495 = vmatprep.subr.mxu0 0.0
        %1496 = vmatpush1.msra.mxu0 0.0
        %1497 = vmatprep.subr.mxu0 0.0
        %1498 = vmatpush1.msra.mxu0 0.0
        %1499 = vmatprep.subr.mxu0 0.0
        %1500 = vmatpush1.msra.mxu0 0.0
        %1501 = vmatprep.subr.mxu0 0.0
        %1502 = vmatpush1.msra.mxu0 0.0
        %1503 = vmatprep.subr.mxu0 0.0
        %1504 = vmatpush1.msra.mxu0 0.0
        %1505 = vmatprep.subr.mxu0 0.0
        %1506 = vmatpush1.msra.mxu0 0.0
        %1507 = vmatprep.subr.mxu0 0.0
        %1508 = vmatpush1.msra.mxu0 0.0
        %1509 = vmatprep.mubr.f32.mxu0 0.0
        %1510 = vmatmul.mubr.f32.gmra.mrb[0].mxu0 %v1440
        %v1511 = vpop.f32.mrb[0].mxu0
        %v1512 = vadd.f32 0.0, %v1511
        %v1513 = vpop.f32.mrb[0].mxu0
        %1514 = vmatprep.mubr.f32.mxu0 0.0
        %1515 = vmatmul.mubr.f32.gmra.mrb[0].mxu0 %v1443
        %v1516 = vpop.f32.mrb[0].mxu0
        %v1517 = vadd.f32 0.0, %v1516
        %v1518 = vpop.f32.mrb[0].mxu0
        %1519 = vdwg.mxu0
        %1522 = vrot.lane.b32.xlu0 %v1512, 16
        %v1523 = vpop.permute.xlu0 %1522
        %1524 = vrot.lane.b32.xlu0 %v1517, 16
        %v1525 = vpop.permute.xlu0 %1524
        %vm1528 = vcmask 195712
        %1529 = vst.msk [vmem:[#allocation5] sm:$0xff] %vm1528, %v1523
        %1530 = vst.msk [vmem:[#allocation5 + $0x8] sm:$0xff] %vm1528, %v1525
        %v1531 = vld [vmem:[#allocation2] sm:$0xff]
        %v1532 = vld [vmem:[#allocation2 + $0x8] sm:$0xff]
        %v1533 = vld [vmem:[#allocation3] sm:$0xff]
        %v1534 = vld [vmem:[#allocation3 + $0x8] sm:$0xff]
        %v1535 = vld [vmem:[#allocation4] sm:$0xff]
        %v1536 = vld [vmem:[#allocation4 + $0x8] sm:$0xff]
        %1539 = vrot.lane.b32.xlu0 %v1531, 104
        %v1540 = vpop.permute.xlu0 %1539
        %1541 = vrot.lane.b32.xlu0 %v1532, 104
        %v1542 = vpop.permute.xlu0 %1541
        %1545 = vrot.lane.b32.xlu0 %v1533, 104
        %v1546 = vpop.permute.xlu0 %1545
        %1547 = vrot.lane.b32.xlu0 %v1534, 104
        %v1548 = vpop.permute.xlu0 %1547
        %v1549 = vsel %vm871, %v1540, 0
        %v1551 = vsel %vm871, %v1542, 0
        %v1553 = vsel %vm871, %v1546, 0
        %v1555 = vsel %vm871, %v1548, 0
        %1557 = vmatprep.subr.mxu0 0.0
        %1558 = vmatpush1.xpose.msra.mxu0 %v1553
        %1559 = vmatprep.subr.mxu0 0.0
        %1560 = vmatpush1.xpose.msra.mxu0 %v1555
        %1561 = vmatprep.subr.mxu0 0.0
        %1562 = vmatpush1.xpose.msra.mxu0 0.0
        %1563 = vmatprep.subr.mxu0 0.0
        %1564 = vmatpush1.xpose.msra.mxu0 0.0
        %1565 = vmatprep.subr.mxu0 0.0
        %1566 = vmatpush1.xpose.msra.mxu0 0.0
        %1567 = vmatprep.subr.mxu0 0.0
        %1568 = vmatpush1.xpose.msra.mxu0 0.0
        %1569 = vmatprep.subr.mxu0 0.0
        %1570 = vmatpush1.xpose.msra.mxu0 0.0
        %1571 = vmatprep.subr.mxu0 0.0
        %1572 = vmatpush1.xpose.msra.mxu0 0.0
        %1573 = vmatprep.subr.mxu0 0.0
        %1574 = vmatpush1.xpose.msra.mxu0 0.0
        %1575 = vmatprep.subr.mxu0 0.0
        %1576 = vmatpush1.xpose.msra.mxu0 0.0
        %1577 = vmatprep.subr.mxu0 0.0
        %1578 = vmatpush1.xpose.msra.mxu0 0.0
        %1579 = vmatprep.subr.mxu0 0.0
        %1580 = vmatpush1.xpose.msra.mxu0 0.0
        %1581 = vmatprep.subr.mxu0 0.0
        %1582 = vmatpush1.xpose.msra.mxu0 0.0
        %1583 = vmatprep.subr.mxu0 0.0
        %1584 = vmatpush1.xpose.msra.mxu0 0.0
        %1585 = vmatprep.subr.mxu0 0.0
        %1586 = vmatpush1.xpose.msra.mxu0 0.0
        %1587 = vmatprep.subr.mxu0 0.0
        %1588 = vmatpush1.xpose.msra.mxu0 0.0
        %1589 = vmatprep.subr.mxu0 0.0
        %1590 = vmatpush1.xpose.msra.mxu0 0.0
        %1591 = vmatprep.subr.mxu0 0.0
        %1592 = vmatpush1.xpose.msra.mxu0 0.0
        %1593 = vmatprep.subr.mxu0 0.0
        %1594 = vmatpush1.xpose.msra.mxu0 0.0
        %1595 = vmatprep.subr.mxu0 0.0
        %1596 = vmatpush1.xpose.msra.mxu0 0.0
        %1597 = vmatprep.subr.mxu0 0.0
        %1598 = vmatpush1.xpose.msra.mxu0 0.0
        %1599 = vmatprep.subr.mxu0 0.0
        %1600 = vmatpush1.xpose.msra.mxu0 0.0
        %1601 = vmatprep.subr.mxu0 0.0
        %1602 = vmatpush1.xpose.msra.mxu0 0.0
        %1603 = vmatprep.subr.mxu0 0.0
        %1604 = vmatpush1.xpose.msra.mxu0 0.0
        %1605 = vmatprep.subr.mxu0 0.0
        %1606 = vmatpush1.xpose.msra.mxu0 0.0
        %1607 = vmatprep.subr.mxu0 0.0
        %1608 = vmatpush1.xpose.msra.mxu0 0.0
        %1609 = vmatprep.subr.mxu0 0.0
        %1610 = vmatpush1.xpose.msra.mxu0 0.0
        %1611 = vmatprep.subr.mxu0 0.0
        %1612 = vmatpush1.xpose.msra.mxu0 0.0
        %1613 = vmatprep.subr.mxu0 0.0
        %1614 = vmatpush1.xpose.msra.mxu0 0.0
        %1615 = vmatprep.subr.mxu0 0.0
        %1616 = vmatpush1.xpose.msra.mxu0 0.0
        %1617 = vmatprep.subr.mxu0 0.0
        %1618 = vmatpush1.xpose.msra.mxu0 0.0
        %1619 = vmatprep.subr.mxu0 0.0
        %1620 = vmatpush1.xpose.msra.mxu0 0.0
        %1621 = vmatprep.mubr.f32.mxu0 0.0
        %1622 = vmatmul.mubr.f32.gmra.mrb[0].mxu0 %v1549
        %v1623 = vpop.f32.mrb[0].mxu0
        %v1624 = vadd.f32 0.0, %v1623
        %v1625 = vpop.f32.mrb[0].mxu0
        %1626 = vmatprep.mubr.f32.mxu0 0.0
        %1627 = vmatmul.mubr.f32.gmra.mrb[0].mxu0 %v1551
        %v1628 = vpop.f32.mrb[0].mxu0
        %v1629 = vadd.f32 0.0, %v1628
        %v1630 = vpop.f32.mrb[0].mxu0
        %1631 = vdwg.mxu0
        %v1632 = vmul.f32 %v1624, 0.35355338
        %v1633 = vmul.f32 %v1629, 0.35355338
        %v1634 = vsel %vm961, %v1632, -inf
        %1635 = vmax.xlane.f32.xlu0 %v1634
        %v1636 = vpop.xlane.xlu0 %1635
        %v1637 = vsel %vm961, %v1633, -inf
        %1638 = vmax.xlane.f32.xlu0 %v1637
        %v1639 = vpop.xlane.xlu0 %1638
        %v1640 = vsub.f32 %v1632, %v1636
        %v1641 = vsub.f32 %v1633, %v1639
        %v1642 = vmul.f32 %v1640, 1.442695
        %v1643 = vpow.pop %v1642
        %v1644 = vmul.f32 %v1641, 1.442695
        %v1645 = vpow.pop %v1644
        %v1646 = vsel %vm961, %v1643, 0.0
        %1647 = vadd.xlane.f32.xlu0 %v1646
        %v1648 = vpop.xlane.xlu0 %1647
        %v1649 = vsel %vm961, %v1645, 0.0
        %1650 = vadd.xlane.f32.xlu0 %v1649
        %v1651 = vpop.xlane.xlu0 %1650
        %v1652 = vmul.f32 %v1648, 1.000001
        %v1653 = vmul.f32 %v1651, 1.000001
        %v1654 = vrcp.pop %v1652
        %v1655 = vrcp.pop %v1653
        %v1656 = vmul.f32 %v1643, %v1654
        %v1657 = vmul.f32 %v1645, %v1655
        %s1658 = scalar_lea.vmem %s575, 48 [#allocation19]
        %1659 = vst.msk [vmem:[%s1658] sm:$0xff] %vm961, %v1656
        %1660 = vst.msk [vmem:[%s1658 + $0x8] sm:$0xff] %vm961, %v1657
        %1663 = vrot.lane.b32.xlu0 %v1535, 104
        %v1664 = vpop.permute.xlu0 %1663
        %1665 = vrot.lane.b32.xlu0 %v1536, 104
        %v1666 = vpop.permute.xlu0 %1665
        %v1670 = vsel %vm961, %v1656, 0
        %v1673 = vsel %vm961, %v1657, 0
        %1675 = vmatprep.subr.mxu0 0.0
        %1676 = vmatpush1.msra.mxu0 %v1664
        %1677 = vmatprep.subr.mxu0 0.0
        %1678 = vmatpush1.msra.mxu0 %v1666
        %1679 = vmatprep.subr.mxu0 0.0
        %1680 = vmatpush1.msra.mxu0 0.0
        %1681 = vmatprep.subr.mxu0 0.0
        %1682 = vmatpush1.msra.mxu0 0.0
        %1683 = vmatprep.subr.mxu0 0.0
        %1684 = vmatpush1.msra.mxu0 0.0
        %1685 = vmatprep.subr.mxu0 0.0
        %1686 = vmatpush1.msra.mxu0 0.0
        %1687 = vmatprep.subr.mxu0 0.0
        %1688 = vmatpush1.msra.mxu0 0.0
        %1689 = vmatprep.subr.mxu0 0.0
        %1690 = vmatpush1.msra.mxu0 0.0
        %1691 = vmatprep.subr.mxu0 0.0
        %1692 = vmatpush1.msra.mxu0 0.0
        %1693 = vmatprep.subr.mxu0 0.0
        %1694 = vmatpush1.msra.mxu0 0.0
        %1695 = vmatprep.subr.mxu0 0.0
        %1696 = vmatpush1.msra.mxu0 0.0
        %1697 = vmatprep.subr.mxu0 0.0
        %1698 = vmatpush1.msra.mxu0 0.0
        %1699 = vmatprep.subr.mxu0 0.0
        %1700 = vmatpush1.msra.mxu0 0.0
        %1701 = vmatprep.subr.mxu0 0.0
        %1702 = vmatpush1.msra.mxu0 0.0
        %1703 = vmatprep.subr.mxu0 0.0
        %1704 = vmatpush1.msra.mxu0 0.0
        %1705 = vmatprep.subr.mxu0 0.0
        %1706 = vmatpush1.msra.mxu0 0.0
        %1707 = vmatprep.subr.mxu0 0.0
        %1708 = vmatpush1.msra.mxu0 0.0
        %1709 = vmatprep.subr.mxu0 0.0
        %1710 = vmatpush1.msra.mxu0 0.0
        %1711 = vmatprep.subr.mxu0 0.0
        %1712 = vmatpush1.msra.mxu0 0.0
        %1713 = vmatprep.subr.mxu0 0.0
        %1714 = vmatpush1.msra.mxu0 0.0
        %1715 = vmatprep.subr.mxu0 0.0
        %1716 = vmatpush1.msra.mxu0 0.0
        %1717 = vmatprep.subr.mxu0 0.0
        %1718 = vmatpush1.msra.mxu0 0.0
        %1719 = vmatprep.subr.mxu0 0.0
        %1720 = vmatpush1.msra.mxu0 0.0
        %1721 = vmatprep.subr.mxu0 0.0
        %1722 = vmatpush1.msra.mxu0 0.0
        %1723 = vmatprep.subr.mxu0 0.0
        %1724 = vmatpush1.msra.mxu0 0.0
        %1725 = vmatprep.subr.mxu0 0.0
        %1726 = vmatpush1.msra.mxu0 0.0
        %1727 = vmatprep.subr.mxu0 0.0
        %1728 = vmatpush1.msra.mxu0 0.0
        %1729 = vmatprep.subr.mxu0 0.0
        %1730 = vmatpush1.msra.mxu0 0.0
        %1731 = vmatprep.subr.mxu0 0.0
        %1732 = vmatpush1.msra.mxu0 0.0
        %1733 = vmatprep.subr.mxu0 0.0
        %1734 = vmatpush1.msra.mxu0 0.0
        %1735 = vmatprep.subr.mxu0 0.0
        %1736 = vmatpush1.msra.mxu0 0.0
        %1737 = vmatprep.subr.mxu0 0.0
        %1738 = vmatpush1.msra.mxu0 0.0
        %1739 = vmatprep.mubr.f32.mxu0 0.0
        %1740 = vmatmul.mubr.f32.gmra.mrb[0].mxu0 %v1670
        %v1741 = vpop.f32.mrb[0].mxu0
        %v1742 = vadd.f32 0.0, %v1741
        %v1743 = vpop.f32.mrb[0].mxu0
        %1744 = vmatprep.mubr.f32.mxu0 0.0
        %1745 = vmatmul.mubr.f32.gmra.mrb[0].mxu0 %v1673
        %v1746 = vpop.f32.mrb[0].mxu0
        %v1747 = vadd.f32 0.0, %v1746
        %v1748 = vpop.f32.mrb[0].mxu0
        %1749 = vdwg.mxu0
        %1752 = vrot.lane.b32.xlu0 %v1742, 24
        %v1753 = vpop.permute.xlu0 %1752
        %1754 = vrot.lane.b32.xlu0 %v1747, 24
        %v1755 = vpop.permute.xlu0 %1754
        %vm1758 = vcmask 261312
        %1759 = vst.msk [vmem:[#allocation5] sm:$0xff] %vm1758, %v1753
        %1760 = vst.msk [vmem:[#allocation5 + $0x8] sm:$0xff] %vm1758, %v1755
        %v1761 = vld [vmem:[#allocation5] sm:$0xff]
        %v1762 = vld [vmem:[#allocation5 + $0x8] sm:$0xff]
        %v1763 = vld [vmem:[%s9] sm:$0xff]
        %v1764 = vld [vmem:[%s9 + $0x8] sm:$0xff]
        %v1765 = vld [vmem:[%s9 + $0x10] sm:$0xff]
        %v1766 = vld [vmem:[%s9 + $0x18] sm:$0xff]
        %v1767 = vld [vmem:[%s10] sm:$0x1]
        %v1769 = vlaneseq
        %v1770 = vshrl.u32 %v1769, 7
        %v1771 = vsub.s32 0, %v1770
        %v1772 = vrot.slane %v1767, %v1771
        %v1775 = vsel %vm589, %v1761, 0
        %v1778 = vsel %vm589, %v1762, 0
        %1780 = vmatprep.subr.mxu0 0.0
        %1781 = vmatpush1.msra.mxu0 %v1763
        %1782 = vmatprep.subr.mxu0 0.0
        %1783 = vmatpush1.msra.mxu0 %v1764
        %1784 = vmatprep.subr.mxu0 0.0
        %1785 = vmatpush1.msra.mxu0 %v1765
        %1786 = vmatprep.subr.mxu0 0.0
        %1787 = vmatpush1.msra.mxu0 %v1766
        %1788 = vmatprep.subr.mxu0 0.0
        %1789 = vmatpush1.msra.mxu0 0.0
        %1790 = vmatprep.subr.mxu0 0.0
        %1791 = vmatpush1.msra.mxu0 0.0
        %1792 = vmatprep.subr.mxu0 0.0
        %1793 = vmatpush1.msra.mxu0 0.0
        %1794 = vmatprep.subr.mxu0 0.0
        %1795 = vmatpush1.msra.mxu0 0.0
        %1796 = vmatprep.subr.mxu0 0.0
        %1797 = vmatpush1.msra.mxu0 0.0
        %1798 = vmatprep.subr.mxu0 0.0
        %1799 = vmatpush1.msra.mxu0 0.0
        %1800 = vmatprep.subr.mxu0 0.0
        %1801 = vmatpush1.msra.mxu0 0.0
        %1802 = vmatprep.subr.mxu0 0.0
        %1803 = vmatpush1.msra.mxu0 0.0
        %1804 = vmatprep.subr.mxu0 0.0
        %1805 = vmatpush1.msra.mxu0 0.0
        %1806 = vmatprep.subr.mxu0 0.0
        %1807 = vmatpush1.msra.mxu0 0.0
        %1808 = vmatprep.subr.mxu0 0.0
        %1809 = vmatpush1.msra.mxu0 0.0
        %1810 = vmatprep.subr.mxu0 0.0
        %1811 = vmatpush1.msra.mxu0 0.0
        %1812 = vmatprep.subr.mxu0 0.0
        %1813 = vmatpush1.msra.mxu0 0.0
        %1814 = vmatprep.subr.mxu0 0.0
        %1815 = vmatpush1.msra.mxu0 0.0
        %1816 = vmatprep.subr.mxu0 0.0
        %1817 = vmatpush1.msra.mxu0 0.0
        %1818 = vmatprep.subr.mxu0 0.0
        %1819 = vmatpush1.msra.mxu0 0.0
        %1820 = vmatprep.subr.mxu0 0.0
        %1821 = vmatpush1.msra.mxu0 0.0
        %1822 = vmatprep.subr.mxu0 0.0
        %1823 = vmatpush1.msra.mxu0 0.0
        %1824 = vmatprep.subr.mxu0 0.0
        %1825 = vmatpush1.msra.mxu0 0.0
        %1826 = vmatprep.subr.mxu0 0.0
        %1827 = vmatpush1.msra.mxu0 0.0
        %1828 = vmatprep.subr.mxu0 0.0
        %1829 = vmatpush1.msra.mxu0 0.0
        %1830 = vmatprep.subr.mxu0 0.0
        %1831 = vmatpush1.msra.mxu0 0.0
        %1832 = vmatprep.subr.mxu0 0.0
        %1833 = vmatpush1.msra.mxu0 0.0
        %1834 = vmatprep.subr.mxu0 0.0
        %1835 = vmatpush1.msra.mxu0 0.0
        %1836 = vmatprep.subr.mxu0 0.0
        %1837 = vmatpush1.msra.mxu0 0.0
        %1838 = vmatprep.subr.mxu0 0.0
        %1839 = vmatpush1.msra.mxu0 0.0
        %1840 = vmatprep.subr.mxu0 0.0
        %1841 = vmatpush1.msra.mxu0 0.0
        %1842 = vmatprep.subr.mxu0 0.0
        %1843 = vmatpush1.msra.mxu0 0.0
        %1844 = vmatprep.mubr.f32.mxu0 0.0
        %1845 = vmatmul.mubr.f32.gmra.mrb[0].mxu0 %v1775
        %v1846 = vpop.f32.mrb[0].mxu0
        %v1847 = vadd.f32 %v1772, %v1846
        %v1848 = vpop.f32.mrb[0].mxu0
        %1849 = vmatprep.mubr.f32.mxu0 0.0
        %1850 = vmatmul.mubr.f32.gmra.mrb[0].mxu0 %v1778
        %v1851 = vpop.f32.mrb[0].mxu0
        %v1852 = vadd.f32 %v1772, %v1851
        %v1853 = vpop.f32.mrb[0].mxu0
        %1854 = vdwg.mxu0
        %1855 = vst.msk [vmem:[%s568] sm:$0xff] %vm589, %v1847
        %1856 = vst.msk [vmem:[%s568 + $0x8] sm:$0xff] %vm589, %v1852
        %s1857 = sand.u32 %s292, 1
        %s1858 = scalar_lea.sflag [#allocation8], %s1857
        %s1859 = sand.u32 %s292, 1
        %s1860 = smul.addr %s1859, 16
        %s1861 = scalar_lea.vmem [#allocation18], %s1860
        %s1862 = sand.u32 %s318, 1
        %s1863 = scalar_lea.sflag [#allocation20], %s1862
        %s1864 = sand.u32 %s318, 1
        %s1865 = smul.addr %s1864, 64
        %s1866 = scalar_lea.vmem [#allocation19], %s1865
        // Predicated region
        $region93: #{tpu_custom_call.1} parent=63 // pred_check
          %p1867 = pneg %p302
        $region94: #{tpu_custom_call.1} parent=63 // pred_check_branch
          %1869 = sbr.rel (%p1867) target = $region96
        $region95: #{tpu_custom_call.1} parent=63 // pred_region
          %s1871 = ssub.s32 256, 256
          %1872 = vsyncadd %s1858, %s1871
          %s1873 = smul.addr %s38, 2
          %s1874 = smul.addr %s1873, 128
          %s1875 = scalar_lea.hbm %s11, %s1874
          %s1876 = sshll.u32 %s1861, 4
          %s1877 = int_to_ptr.vmem [resolvable:$true] %s1876
          %1882 = dma.vmem_to_hbm [thread:$0]  %s1877, 256, %s1875, %s1858, 128, 128, 8
        $region96: #{tpu_custom_call.1} parent=63 // pred_fallthru
          _
        // Predicated region
        $region97: #{tpu_custom_call.1} parent=63 // pred_check
          %p1883 = pneg %p328
        $region98: #{tpu_custom_call.1} parent=63 // pred_check_branch
          %1885 = sbr.rel (%p1883) target = $region100
        $region99: #{tpu_custom_call.1} parent=63 // pred_region
          %s1887 = ssub.s32 1024, 1024
          %1888 = vsyncadd %s1863, %s1887
          %s1889 = smul.addr %s38, 8
          %s1890 = smul.addr %s1889, 128
          %s1891 = scalar_lea.hbm %s12, %s1890
          %s1892 = sshll.u32 %s1866, 4
          %s1893 = int_to_ptr.vmem [resolvable:$true] %s1892
          %1898 = dma.vmem_to_hbm [thread:$0]  %s1893, 1024, %s1891, %s1863, 128, 128, 8
        $region100: #{tpu_custom_call.1} parent=63 // pred_fallthru
          _
      $region64: #{tpu_custom_call.1} parent=5 // pred_fallthru
        _
      %p1899 = scmp.le.s32.totalorder 2, %s33
      // Predicated region
      $region101: #{tpu_custom_call.1} parent=5 // pred_check
        %p1900 = pneg %p1899
      $region102: #{tpu_custom_call.1} parent=5 // pred_check_branch
        %1902 = sbr.rel (%p1900) target = $region104
      $region103: #{tpu_custom_call.1} parent=5 // pred_region
        %s1903 = ssub.s32 %s33, 2
        // Predicated region
        $region105: #{tpu_custom_call.1} parent=103 // pred_check
          %p1904 = pneg %p308
        $region106: #{tpu_custom_call.1} parent=103 // pred_check_branch
          %1906 = sbr.rel (%p1904) target = $region108
        $region107: #{tpu_custom_call.1} parent=103 // pred_region
          %s1907 = sand.u32 %s293, 1
          %s1908 = scalar_lea.sflag [#allocation8], %s1907
          %s1909 = sand.u32 %s293, 1
          %s1910 = smul.addr %s1909, 16
          %s1911 = scalar_lea.vmem [#allocation18], %s1910
          %1912 = dma.done %s1908, 256
        $region108: #{tpu_custom_call.1} parent=103 // pred_fallthru
          _
        // Predicated region
        $region109: #{tpu_custom_call.1} parent=103 // pred_check
          %p1913 = pneg %p334
        $region110: #{tpu_custom_call.1} parent=103 // pred_check_branch
          %1915 = sbr.rel (%p1913) target = $region112
        $region111: #{tpu_custom_call.1} parent=103 // pred_region
          %s1916 = sand.u32 %s319, 1
          %s1917 = scalar_lea.sflag [#allocation20], %s1916
          %s1918 = sand.u32 %s319, 1
          %s1919 = smul.addr %s1918, 64
          %s1920 = scalar_lea.vmem [#allocation19], %s1919
          %1921 = dma.done %s1917, 1024
        $region112: #{tpu_custom_call.1} parent=103 // pred_fallthru
          _
      $region104: #{tpu_custom_call.1} parent=5 // pred_fallthru
        _
    $region6: #{tpu_custom_call.1} parent=1 // loop_footer
      %s37 = sadd.s32 1, %s33
    $region7: #{tpu_custom_call.1} parent=1 // loop_footer_branch
      %32 = sbr.rel target = $region3
    $region8: #{tpu_custom_call.1} parent=1 // loop_exit
      _
    %1922 = vsyncpa [#allocation7], 1
    %s1923 = scalar_lea.sflag [#allocation7], 1
    %1924 = vsyncpa %s1923, 1
    %1925 = vsyncpa [#allocation10], 1
    %s1926 = scalar_lea.sflag [#allocation10], 1
    %1927 = vsyncpa %s1926, 1
    %1928 = vsyncpa [#allocation13], 1
    %1929 = vsyncpa [#allocation16], 1
    %1930 = vsyncpa [#allocation8], 1
    %s1931 = scalar_lea.sflag [#allocation8], 1
    %1932 = vsyncpa %s1931, 1
    %1933 = vsyncpa [#allocation20], 1
    %s1934 = scalar_lea.sflag [#allocation20], 1
    %1935 = vsyncpa %s1934, 1

</llo_original>
